<compile_context>
chip_gen: v7x
topology: tpu7x:2x2x1
jax: 0.10.0
libtpu: 0.0.40
codegen_flags: <defaults>
</compile_context>

<pallas_src>
import functools

import jax
import jax.numpy as jnp
from jax import lax
from jax.experimental import pallas as pl
from jax.experimental.pallas import tpu as pltpu

# ----------------------------- configuration -------------------------------
BATCH = 2
IN_CAPS = 4
IN_DIM = 8
OUT_CAPS = 4
OUT_DIM = 8
H = W = 16
KSIZE = 3
STRIDE = 1          # TODO(synk): stride > 1 would need strided lane gathers in-kernel.
PAD = 1

C_OUT = OUT_CAPS * OUT_DIM          # conv output channels (32)


# --------------------------- Pallas kernel body -----------------------------
def conv_capsule_fused_kernel(x_ref, w_ref, shift_ref, v_ref, col_ref, *,
                              ksize, wpad, s_pad, batch, out_caps, out_dim):
    """Fused in-VMEM im2col + ONE large-K GEMM + folded BN/routing affine + squash.

    x_ref:     (B, in_caps*in_dim, flat)     zero-padded image, spatially flattened
    w_ref:     (C_OUT, 9*in_caps*in_dim)     weights pre-tiled over in_caps, rows match
                                             col_ref, bn_scale/out_caps already folded in
    shift_ref: (C_OUT, 1)                    folded  bn_shift * in_caps / out_caps
    v_ref:     (C_OUT, B*s_pad)              squashed output, lane-dense batch-major cols
    col_ref:   (9*in_caps*in_dim, B*s_pad)   VMEM im2col scratch (never touches HBM)
    """
    icd = x_ref.shape[1]                                      # in_caps * in_dim

    # Build the implicit-GEMM operand: 9 statically lane-shifted copies of each
    # batch's slab, written at 8-aligned sublane / 128-aligned lane offsets.
    for b in range(batch):
        xb = x_ref[b]                                         # (icd, flat) -> vregs once
        for k in range(ksize * ksize):
            ki, kj = divmod(k, ksize)
            off = ki * wpad + kj                              # stride == 1
            col_ref[k * icd:(k + 1) * icd, b * s_pad:(b + 1) * s_pad] = \
                xb[:, off:off + s_pad]

    # ONE large-K GEMM (K = 9*in_caps*in_dim) covering conv + sum over input capsules.
    # BN scale and the uniform 1/out_caps routing coefficient are folded into w.
    s = jnp.dot(w_ref[...], col_ref[...], preferred_element_type=jnp.float32)
    s = s + shift_ref[...]                                    # (C_OUT, B*s_pad)

    # Squash per output capsule (groups of out_dim channels): sublane group-reduce +
    # broadcast instead of mask matmuls, EUP approx reciprocal instead of divides.
    n = s.shape[-1]
    s3 = s.reshape(out_caps, out_dim, n)                      # tile-aligned split
    norm_sq = jnp.sum(s3 * s3, axis=1, keepdims=True)         # (out_caps, 1, n)
    norm = jnp.sqrt(norm_sq)
    sq_scale = norm_sq * pl.reciprocal((1.0 + norm_sq) * (norm + 1e-8), approx=True)
    v_ref[...] = (sq_scale * s3).reshape(out_caps * out_dim, n)


# ------------------------------- host glue ---------------------------------
@jax.jit
def conv_capsule_forward(in_capsules, conv_w, bn_scale, bn_shift):
    """in_capsules: (B, in_caps, in_dim, H, W) float32 (PyTorch NCHW convention)."""
    assert STRIDE == 1
    b, i_caps, c_in, h, w = in_capsules.shape
    kh = kw = KSIZE
    hp, wp = h + 2 * PAD, w + 2 * PAD
    ho = (h + 2 * PAD - kh) // STRIDE + 1
    wo = (w + 2 * PAD - kw) // STRIDE + 1
    s_out = ho * wp                                   # meaningful padded-width columns
    s_pad = ((s_out + 127) // 128) * 128              # lane-dense GEMM/store width
    max_off = (kh - 1) * wp + (kw - 1)
    flat = ((max(hp * wp, s_pad + max_off) + 127) // 128) * 128

    # glue: zero-pad spatially, fold (in_caps, in_dim) into one contraction axis,
    # flatten spatial dims and pad lanes with zeros.
    xp = jnp.pad(in_capsules, ((0, 0), (0, 0), (0, 0), (PAD, PAD), (PAD, PAD)))
    x_flat = xp.reshape(b, i_caps * c_in, hp * wp)
    x_flat = jnp.pad(x_flat, ((0, 0), (0, 0), (0, flat - hp * wp)))

    # weights: (Cout, Cin, kh, kw) -> feature order (tap, in_cap, cin) matching the
    # im2col rows, tiled over in_caps; fold bn_scale / out_caps per output channel.
    k_feat = kh * kw * i_caps * c_in
    w_taps = conv_w.transpose(0, 2, 3, 1).reshape(C_OUT, kh * kw, 1, c_in)
    w_big = jnp.broadcast_to(w_taps, (C_OUT, kh * kw, i_caps, c_in)).reshape(C_OUT, k_feat)
    w_big = w_big * (bn_scale / OUT_CAPS)[:, None]
    shift_eff = (bn_shift * (i_caps / OUT_CAPS)).reshape(C_OUT, 1)

    kernel = functools.partial(conv_capsule_fused_kernel,
                               ksize=kh, wpad=wp, s_pad=s_pad, batch=b,
                               out_caps=OUT_CAPS, out_dim=OUT_DIM)

    v_pad = pl.pallas_call(
        kernel,
        out_shape=jax.ShapeDtypeStruct((C_OUT, b * s_pad), jnp.float32),
        grid_spec=pltpu.PrefetchScalarGridSpec(
            num_scalar_prefetch=0,
            grid=(1,),                                   # single fused step (batch folded)
            in_specs=[
                pl.BlockSpec((b, i_caps * c_in, flat), lambda n: (0, 0, 0)),
                pl.BlockSpec((C_OUT, k_feat), lambda n: (0, 0)),
                pl.BlockSpec((C_OUT, 1), lambda n: (0, 0)),
            ],
            out_specs=pl.BlockSpec((C_OUT, b * s_pad), lambda n: (0, 0)),
            scratch_shapes=[pltpu.VMEM((k_feat, b * s_pad), jnp.float32)],
        ),
        compiler_params=pltpu.CompilerParams(dimension_semantics=("arbitrary",)),
    )(x_flat, w_big, shift_eff)

    # glue: (C_OUT, B*s_pad) -> (B, out_caps, out_dim, Ho, Wp) -> drop padded columns
    v3 = jnp.transpose(v_pad.reshape(C_OUT, b, s_pad), (1, 0, 2))[:, :, :s_out]
    v_j = v3.reshape(b, OUT_CAPS, OUT_DIM, ho, wp)[..., :wo]

    # c_ij = softmax over out_caps of zeros == uniform 1/out_caps (ITER is ignored)
    c_ij = jnp.full((b, i_caps, OUT_CAPS, 1, ho, wo), 1.0 / OUT_CAPS, jnp.float32)
    return v_j, c_ij


# ------------------------- pure-JAX reference ------------------------------
def reference_forward(in_capsules, conv_w, bn_scale, bn_shift):
    b, i_caps, c_in, h, w = in_capsules.shape
    x = in_capsules.reshape(b * i_caps, c_in, h, w)
    y = lax.conv_general_dilated(
        x, conv_w, window_strides=(STRIDE, STRIDE),
        padding=((PAD, PAD), (PAD, PAD)),
        dimension_numbers=("NCHW", "OIHW", "NCHW"))
    y = y * bn_scale[None, :, None, None] + bn_shift[None, :, None, None]
    _, _, ho, wo = y.shape
    preds = y.reshape(b, i_caps, OUT_CAPS, OUT_DIM, ho, wo)
    c_ij = jnp.full((b, i_caps, OUT_CAPS, 1, ho, wo), 1.0 / OUT_CAPS, jnp.float32)
    s_j = (c_ij * preds).sum(axis=1, keepdims=True)
    norm = jnp.sqrt(jnp.sum(s_j * s_j, axis=3, keepdims=True))
    scale = norm ** 2 / (1.0 + norm ** 2) / (norm + 1e-8)
    v_j = scale * s_j
    return v_j[:, 0], c_ij


# --------------------------------- main -------------------------------------
if __name__ == "__main__":
    key = jax.random.PRNGKey(0)
    k_x, k_w, k_g, k_b, k_m, k_v = jax.random.split(key, 6)

    # deterministic synthetic parameters (Conv2d + BatchNorm2d eval stats)
    in_capsules = jax.random.normal(k_x, (BATCH, IN_CAPS, IN_DIM, H, W), jnp.float32)
    conv_w = jax.random.normal(k_w, (C_OUT, IN_DIM, KSIZE, KSIZE), jnp.float32) * 0.1
    gamma = 1.0 + 0.1 * jax.random.normal(k_g, (C_OUT,), jnp.float32)
    beta = 0.1 * jax.random.normal(k_b, (C_OUT,), jnp.float32)
    run_mean = 0.05 * jax.random.normal(k_m, (C_OUT,), jnp.float32)
    run_var = 1.0 + 0.1 * jnp.abs(jax.random.normal(k_v, (C_OUT,), jnp.float32))
    bn_eps = 1e-5
    bn_scale = gamma / jnp.sqrt(run_var + bn_eps)
    bn_shift = beta - run_mean * bn_scale

    v_j, c_ij = conv_capsule_forward(in_capsules, conv_w, bn_scale, bn_shift)
    v_j = jax.block_until_ready(v_j)
    c_ij = jax.block_until_ready(c_ij)

    v_ref, c_ref = reference_forward(in_capsules, conv_w, bn_scale, bn_shift)

    assert v_j.shape == (BATCH, OUT_CAPS, OUT_DIM, H, W), v_j.shape
    assert c_ij.shape == (BATCH, IN_CAPS, OUT_CAPS, 1, H, W), c_ij.shape
    assert jnp.allclose(v_j, v_ref, rtol=2e-3, atol=2e-3), float(
        jnp.max(jnp.abs(v_j - v_ref)))
    assert jnp.allclose(c_ij, c_ref), "c_ij mismatch"

    print("KERNEL_OK")
</pallas_src>

<mosaic_0001>
module attributes {stable_mosaic.version = 11 : i64} {
  func.func @conv_capsule_fused_kernel(%arg0: i32, %arg1: memref<2x32x512xf32, #tpu.memory_space<vmem>>, %arg2: memref<32x288xf32, #tpu.memory_space<vmem>>, %arg3: memref<32x1xf32, #tpu.memory_space<vmem>>, %arg4: memref<32x768xf32, #tpu.memory_space<vmem>>, %arg5: memref<288x768xf32, #tpu.memory_space<vmem>>) attributes {dimension_semantics = [#tpu.dimension_semantics<arbitrary>], iteration_bounds = array<i64: 1>, scalar_prefetch = 0 : i64, scratch_operands = 1 : i64, tpu.core_type = #tpu.core_type<tc>, window_params = [{pipeline_mode = #tpu.pipeline_mode<synchronous>, transform_indices = @transform_0, window_bounds = array<i64: 2, 32, 512>}, {pipeline_mode = #tpu.pipeline_mode<synchronous>, transform_indices = @transform_1, window_bounds = array<i64: 32, 288>}, {pipeline_mode = #tpu.pipeline_mode<synchronous>, transform_indices = @transform_2, window_bounds = array<i64: 32, 1>}, {pipeline_mode = #tpu.pipeline_mode<synchronous>, transform_indices = @transform_3, window_bounds = array<i64: 32, 768>}]} {
    %c0 = arith.constant 0 : index
    %c0_0 = arith.constant 0 : index
    %c0_1 = arith.constant 0 : index
    %0 = vector.load %arg1[%c0, %c0_0, %c0_1] : memref<2x32x512xf32, #tpu.memory_space<vmem>>, vector<1x32x512xf32>
    %1 = vector.shape_cast %0 : vector<1x32x512xf32> to vector<32x512xf32>
    %2 = vector.extract_strided_slice %1 {offsets = [0, 0], sizes = [32, 384], strides = [1, 1]} : vector<32x512xf32> to vector<32x384xf32>
    %c0_2 = arith.constant 0 : index
    %c0_3 = arith.constant 0 : index
    %3 = vector.load %arg5[%c0_2, %c0_3] : memref<288x768xf32, #tpu.memory_space<vmem>>, vector<32x384xf32>
    tpu.vector_store %arg5[%c0_2, %c0_3], %2 {strides = array<i32>} : memref<288x768xf32, #tpu.memory_space<vmem>>, vector<32x384xf32>,
    %4 = vector.extract_strided_slice %1 {offsets = [0, 1], sizes = [32, 384], strides = [1, 1]} : vector<32x512xf32> to vector<32x384xf32>
    %c32 = arith.constant 32 : index
    %c0_4 = arith.constant 0 : index
    %5 = vector.load %arg5[%c32, %c0_4] : memref<288x768xf32, #tpu.memory_space<vmem>>, vector<32x384xf32>
    tpu.vector_store %arg5[%c32, %c0_4], %4 {strides = array<i32>} : memref<288x768xf32, #tpu.memory_space<vmem>>, vector<32x384xf32>,
    %6 = vector.extract_strided_slice %1 {offsets = [0, 2], sizes = [32, 384], strides = [1, 1]} : vector<32x512xf32> to vector<32x384xf32>
    %c64 = arith.constant 64 : index
    %c0_5 = arith.constant 0 : index
    %7 = vector.load %arg5[%c64, %c0_5] : memref<288x768xf32, #tpu.memory_space<vmem>>, vector<32x384xf32>
    tpu.vector_store %arg5[%c64, %c0_5], %6 {strides = array<i32>} : memref<288x768xf32, #tpu.memory_space<vmem>>, vector<32x384xf32>,
    %8 = vector.extract_strided_slice %1 {offsets = [0, 18], sizes = [32, 384], strides = [1, 1]} : vector<32x512xf32> to vector<32x384xf32>
    %c96 = arith.constant 96 : index
    %c0_6 = arith.constant 0 : index
    %9 = vector.load %arg5[%c96, %c0_6] : memref<288x768xf32, #tpu.memory_space<vmem>>, vector<32x384xf32>
    tpu.vector_store %arg5[%c96, %c0_6], %8 {strides = array<i32>} : memref<288x768xf32, #tpu.memory_space<vmem>>, vector<32x384xf32>,
    %10 = vector.extract_strided_slice %1 {offsets = [0, 19], sizes = [32, 384], strides = [1, 1]} : vector<32x512xf32> to vector<32x384xf32>
    %c128 = arith.constant 128 : index
    %c0_7 = arith.constant 0 : index
    %11 = vector.load %arg5[%c128, %c0_7] : memref<288x768xf32, #tpu.memory_space<vmem>>, vector<32x384xf32>
    tpu.vector_store %arg5[%c128, %c0_7], %10 {strides = array<i32>} : memref<288x768xf32, #tpu.memory_space<vmem>>, vector<32x384xf32>,
    %12 = vector.extract_strided_slice %1 {offsets = [0, 20], sizes = [32, 384], strides = [1, 1]} : vector<32x512xf32> to vector<32x384xf32>
    %c160 = arith.constant 160 : index
    %c0_8 = arith.constant 0 : index
    %13 = vector.load %arg5[%c160, %c0_8] : memref<288x768xf32, #tpu.memory_space<vmem>>, vector<32x384xf32>
    tpu.vector_store %arg5[%c160, %c0_8], %12 {strides = array<i32>} : memref<288x768xf32, #tpu.memory_space<vmem>>, vector<32x384xf32>,
    %14 = vector.extract_strided_slice %1 {offsets = [0, 36], sizes = [32, 384], strides = [1, 1]} : vector<32x512xf32> to vector<32x384xf32>
    %c192 = arith.constant 192 : index
    %c0_9 = arith.constant 0 : index
    %15 = vector.load %arg5[%c192, %c0_9] : memref<288x768xf32, #tpu.memory_space<vmem>>, vector<32x384xf32>
    tpu.vector_store %arg5[%c192, %c0_9], %14 {strides = array<i32>} : memref<288x768xf32, #tpu.memory_space<vmem>>, vector<32x384xf32>,
    %16 = vector.extract_strided_slice %1 {offsets = [0, 37], sizes = [32, 384], strides = [1, 1]} : vector<32x512xf32> to vector<32x384xf32>
    %c224 = arith.constant 224 : index
    %c0_10 = arith.constant 0 : index
    %17 = vector.load %arg5[%c224, %c0_10] : memref<288x768xf32, #tpu.memory_space<vmem>>, vector<32x384xf32>
    tpu.vector_store %arg5[%c224, %c0_10], %16 {strides = array<i32>} : memref<288x768xf32, #tpu.memory_space<vmem>>, vector<32x384xf32>,
    %18 = vector.extract_strided_slice %1 {offsets = [0, 38], sizes = [32, 384], strides = [1, 1]} : vector<32x512xf32> to vector<32x384xf32>
    %c256 = arith.constant 256 : index
    %c0_11 = arith.constant 0 : index
    %19 = vector.load %arg5[%c256, %c0_11] : memref<288x768xf32, #tpu.memory_space<vmem>>, vector<32x384xf32>
    tpu.vector_store %arg5[%c256, %c0_11], %18 {strides = array<i32>} : memref<288x768xf32, #tpu.memory_space<vmem>>, vector<32x384xf32>,
    %c1 = arith.constant 1 : index
    %c0_12 = arith.constant 0 : index
    %c0_13 = arith.constant 0 : index
    %20 = vector.load %arg1[%c1, %c0_12, %c0_13] : memref<2x32x512xf32, #tpu.memory_space<vmem>>, vector<1x32x512xf32>
    %21 = vector.shape_cast %20 : vector<1x32x512xf32> to vector<32x512xf32>
    %22 = vector.extract_strided_slice %21 {offsets = [0, 0], sizes = [32, 384], strides = [1, 1]} : vector<32x512xf32> to vector<32x384xf32>
    %c0_14 = arith.constant 0 : index
    %c384 = arith.constant 384 : index
    %23 = vector.load %arg5[%c0_14, %c384] : memref<288x768xf32, #tpu.memory_space<vmem>>, vector<32x384xf32>
    tpu.vector_store %arg5[%c0_14, %c384], %22 {strides = array<i32>} : memref<288x768xf32, #tpu.memory_space<vmem>>, vector<32x384xf32>,
    %24 = vector.extract_strided_slice %21 {offsets = [0, 1], sizes = [32, 384], strides = [1, 1]} : vector<32x512xf32> to vector<32x384xf32>
    %c32_15 = arith.constant 32 : index
    %c384_16 = arith.constant 384 : index
    %25 = vector.load %arg5[%c32_15, %c384_16] : memref<288x768xf32, #tpu.memory_space<vmem>>, vector<32x384xf32>
    tpu.vector_store %arg5[%c32_15, %c384_16], %24 {strides = array<i32>} : memref<288x768xf32, #tpu.memory_space<vmem>>, vector<32x384xf32>,
    %26 = vector.extract_strided_slice %21 {offsets = [0, 2], sizes = [32, 384], strides = [1, 1]} : vector<32x512xf32> to vector<32x384xf32>
    %c64_17 = arith.constant 64 : index
    %c384_18 = arith.constant 384 : index
    %27 = vector.load %arg5[%c64_17, %c384_18] : memref<288x768xf32, #tpu.memory_space<vmem>>, vector<32x384xf32>
    tpu.vector_store %arg5[%c64_17, %c384_18], %26 {strides = array<i32>} : memref<288x768xf32, #tpu.memory_space<vmem>>, vector<32x384xf32>,
    %28 = vector.extract_strided_slice %21 {offsets = [0, 18], sizes = [32, 384], strides = [1, 1]} : vector<32x512xf32> to vector<32x384xf32>
    %c96_19 = arith.constant 96 : index
    %c384_20 = arith.constant 384 : index
    %29 = vector.load %arg5[%c96_19, %c384_20] : memref<288x768xf32, #tpu.memory_space<vmem>>, vector<32x384xf32>
    tpu.vector_store %arg5[%c96_19, %c384_20], %28 {strides = array<i32>} : memref<288x768xf32, #tpu.memory_space<vmem>>, vector<32x384xf32>,
    %30 = vector.extract_strided_slice %21 {offsets = [0, 19], sizes = [32, 384], strides = [1, 1]} : vector<32x512xf32> to vector<32x384xf32>
    %c128_21 = arith.constant 128 : index
    %c384_22 = arith.constant 384 : index
    %31 = vector.load %arg5[%c128_21, %c384_22] : memref<288x768xf32, #tpu.memory_space<vmem>>, vector<32x384xf32>
    tpu.vector_store %arg5[%c128_21, %c384_22], %30 {strides = array<i32>} : memref<288x768xf32, #tpu.memory_space<vmem>>, vector<32x384xf32>,
    %32 = vector.extract_strided_slice %21 {offsets = [0, 20], sizes = [32, 384], strides = [1, 1]} : vector<32x512xf32> to vector<32x384xf32>
    %c160_23 = arith.constant 160 : index
    %c384_24 = arith.constant 384 : index
    %33 = vector.load %arg5[%c160_23, %c384_24] : memref<288x768xf32, #tpu.memory_space<vmem>>, vector<32x384xf32>
    tpu.vector_store %arg5[%c160_23, %c384_24], %32 {strides = array<i32>} : memref<288x768xf32, #tpu.memory_space<vmem>>, vector<32x384xf32>,
    %34 = vector.extract_strided_slice %21 {offsets = [0, 36], sizes = [32, 384], strides = [1, 1]} : vector<32x512xf32> to vector<32x384xf32>
    %c192_25 = arith.constant 192 : index
    %c384_26 = arith.constant 384 : index
    %35 = vector.load %arg5[%c192_25, %c384_26] : memref<288x768xf32, #tpu.memory_space<vmem>>, vector<32x384xf32>
    tpu.vector_store %arg5[%c192_25, %c384_26], %34 {strides = array<i32>} : memref<288x768xf32, #tpu.memory_space<vmem>>, vector<32x384xf32>,
    %36 = vector.extract_strided_slice %21 {offsets = [0, 37], sizes = [32, 384], strides = [1, 1]} : vector<32x512xf32> to vector<32x384xf32>
    %c224_27 = arith.constant 224 : index
    %c384_28 = arith.constant 384 : index
    %37 = vector.load %arg5[%c224_27, %c384_28] : memref<288x768xf32, #tpu.memory_space<vmem>>, vector<32x384xf32>
    tpu.vector_store %arg5[%c224_27, %c384_28], %36 {strides = array<i32>} : memref<288x768xf32, #tpu.memory_space<vmem>>, vector<32x384xf32>,
    %38 = vector.extract_strided_slice %21 {offsets = [0, 38], sizes = [32, 384], strides = [1, 1]} : vector<32x512xf32> to vector<32x384xf32>
    %c256_29 = arith.constant 256 : index
    %c384_30 = arith.constant 384 : index
    %39 = vector.load %arg5[%c256_29, %c384_30] : memref<288x768xf32, #tpu.memory_space<vmem>>, vector<32x384xf32>
    tpu.vector_store %arg5[%c256_29, %c384_30], %38 {strides = array<i32>} : memref<288x768xf32, #tpu.memory_space<vmem>>, vector<32x384xf32>,
    %c0_31 = arith.constant 0 : index
    %c0_32 = arith.constant 0 : index
    %40 = vector.load %arg2[%c0_31, %c0_32] : memref<32x288xf32, #tpu.memory_space<vmem>>, vector<32x288xf32>
    %c0_33 = arith.constant 0 : index
    %c0_34 = arith.constant 0 : index
    %41 = vector.load %arg5[%c0_33, %c0_34] : memref<288x768xf32, #tpu.memory_space<vmem>>, vector<288x768xf32>
    %cst = arith.constant dense<0.000000e+00> : vector<32x768xf32>
    %42 = tpu.matmul %40, %41, %cst {dimension_numbers = #tpu.dot_dimension_numbers<[1], [0], [0], [1], [0, 0, 1, 1], [], []>} : vector<32x288xf32>, vector<288x768xf32>, vector<32x768xf32> -> vector<32x768xf32>
    %c0_35 = arith.constant 0 : index
    %c0_36 = arith.constant 0 : index
    %43 = vector.load %arg3[%c0_35, %c0_36] : memref<32x1xf32, #tpu.memory_space<vmem>>, vector<32x1xf32>
    %44 = vector.broadcast %43 : vector<32x1xf32> to vector<32x768xf32>
    %45 = arith.addf %42, %44 : vector<32x768xf32>
    %46 = vector.shape_cast %45 : vector<32x768xf32> to vector<4x8x768xf32>
    %47 = arith.mulf %46, %46 : vector<4x8x768xf32>
    %cst_37 = arith.constant dense<0.000000e+00> : vector<4x768xf32>
    %48 = vector.multi_reduction <add>, %47, %cst_37 [1] : vector<4x8x768xf32> to vector<4x768xf32>
    %49 = vector.shape_cast %48 : vector<4x768xf32> to vector<4x1x768xf32>
    %50 = math.sqrt %49 : vector<4x1x768xf32>
    %cst_38 = arith.constant 1.000000e+00 : f32
    %51 = vector.broadcast %cst_38 : f32 to vector<4x1x768xf32>
    %52 = arith.addf %51, %49 : vector<4x1x768xf32>
    %cst_39 = arith.constant 9.99999993E-9 : f32
    %53 = vector.broadcast %cst_39 : f32 to vector<4x1x768xf32>
    %54 = arith.addf %50, %53 : vector<4x1x768xf32>
    %55 = arith.mulf %52, %54 : vector<4x1x768xf32>
    %56 = tpu.reciprocal %55 {approx = true} : vector<4x1x768xf32> -> vector<4x1x768xf32>
    %57 = arith.mulf %49, %56 : vector<4x1x768xf32>
    %58 = vector.broadcast %57 : vector<4x1x768xf32> to vector<4x8x768xf32>
    %59 = arith.mulf %58, %46 : vector<4x8x768xf32>
    %60 = vector.shape_cast %59 : vector<4x8x768xf32> to vector<32x768xf32>
    %c0_40 = arith.constant 0 : index
    %c0_41 = arith.constant 0 : index
    %61 = vector.load %arg4[%c0_40, %c0_41] : memref<32x768xf32, #tpu.memory_space<vmem>>, vector<32x768xf32>
    tpu.vector_store %arg4[%c0_40, %c0_41], %60 {strides = array<i32>} : memref<32x768xf32, #tpu.memory_space<vmem>>, vector<32x768xf32>,
    return
  }
  func.func @transform_0(%arg0: i32) -> (i32, i32, i32) {
    %c0_i32 = arith.constant 0 : i32
    %c0_i32_0 = arith.constant 0 : i32
    %c0_i32_1 = arith.constant 0 : i32
    %c0_i32_2 = arith.constant 0 : i32
    return %c0_i32, %c0_i32_0, %c0_i32_1 : i32, i32, i32
  }
  func.func @transform_1(%arg0: i32) -> (i32, i32) {
    %c0_i32 = arith.constant 0 : i32
    %c0_i32_0 = arith.constant 0 : i32
    %c0_i32_1 = arith.constant 0 : i32
    return %c0_i32, %c0_i32_0 : i32, i32
  }
  func.func @transform_2(%arg0: i32) -> (i32, i32) {
    %c0_i32 = arith.constant 0 : i32
    %c0_i32_0 = arith.constant 0 : i32
    %c0_i32_1 = arith.constant 0 : i32
    return %c0_i32, %c0_i32_0 : i32, i32
  }
  func.func @transform_3(%arg0: i32) -> (i32, i32) {
    %c0_i32 = arith.constant 0 : i32
    %c0_i32_0 = arith.constant 0 : i32
    %c0_i32_1 = arith.constant 0 : i32
    return %c0_i32, %c0_i32_0 : i32, i32
  }
}

</mosaic_0001>

<llo_original>
// kernel: conv_capsule_forward.1
$region0: #{conv_capsule_forward.1}
  #allocation0 [shape = 'u32[]', space=smem, size = 0x4, offset = 0x4, fixed_abs, tag = 'smem constant byte address 0x4 - core index']
  #allocation1 [shape = 'u32[144,128]{1,0:T(1,128)}', space=vmem, size = 0x12000, scoped, tag = 'internal scratch']
  #allocation2 [shape = 'f32[288,768]{1,0:T(8,128)}', space=vmem, size = 0xd8000, scoped, tag = 'scratch operand']
  %s0 = inlined_call_operand.vmem [shape: f32[2,32,512], index: 0, kind: input, shape index: {}]
  %s1 = inlined_call_operand.vmem [shape: f32[32,288], index: 1, kind: input, shape index: {}]
  %s2 = inlined_call_operand.vmem [shape: f32[32,1], index: 2, kind: input, shape index: {}]
  %s3 = inlined_call_operand.vmem [shape: f32[32,768], index: 3, kind: output, shape index: {}]
  %s4 = sld [smem:[#allocation0]]
  $region22: #{conv_capsule_forward.1} parent=0
    _
  %s6 = ssub.s32 1, %s4
  %s7 = scalar_select 0, %s6, %s4
  // Predicated region
  $region2: #{conv_capsule_forward.1} parent=0 // pred_check
    _
  $region3: #{conv_capsule_forward.1} parent=0 // pred_check_branch
    %9 = sbr.rel (0) target = $region5
  $region4: #{conv_capsule_forward.1} parent=0 // pred_region
    _
  $region5: #{conv_capsule_forward.1} parent=0 // pred_fallthru
    _
  // Predicated region
  $region6: #{conv_capsule_forward.1} parent=0 // pred_check
    _
  $region7: #{conv_capsule_forward.1} parent=0 // pred_check_branch
    %11 = sbr.rel (0) target = $region9
  $region8: #{conv_capsule_forward.1} parent=0 // pred_region
    _
  $region9: #{conv_capsule_forward.1} parent=0 // pred_fallthru
    _
  // Predicated region
  $region10: #{conv_capsule_forward.1} parent=0 // pred_check
    _
  $region11: #{conv_capsule_forward.1} parent=0 // pred_check_branch
    %13 = sbr.rel (0) target = $region13
  $region12: #{conv_capsule_forward.1} parent=0 // pred_region
    _
  $region13: #{conv_capsule_forward.1} parent=0 // pred_fallthru
    _
  %v14 = vld [vmem:[%s0] sm:$0xff]
  %v15 = vld [vmem:[%s0 + $0x8] sm:$0xff]
  %v16 = vld [vmem:[%s0 + $0x10] sm:$0xff]
  %v17 = vld [vmem:[%s0 + $0x18] sm:$0xff]
  %v18 = vld [vmem:[%s0 + $0x20] sm:$0xff]
  %v19 = vld [vmem:[%s0 + $0x28] sm:$0xff]
  %v20 = vld [vmem:[%s0 + $0x30] sm:$0xff]
  %v21 = vld [vmem:[%s0 + $0x38] sm:$0xff]
  %v22 = vld [vmem:[%s0 + $0x40] sm:$0xff]
  %v23 = vld [vmem:[%s0 + $0x48] sm:$0xff]
  %v24 = vld [vmem:[%s0 + $0x50] sm:$0xff]
  %v25 = vld [vmem:[%s0 + $0x58] sm:$0xff]
  %v26 = vld [vmem:[%s0 + $0x60] sm:$0xff]
  %v27 = vld [vmem:[%s0 + $0x68] sm:$0xff]
  %v28 = vld [vmem:[%s0 + $0x70] sm:$0xff]
  %v29 = vld [vmem:[%s0 + $0x78] sm:$0xff]
  %30 = vst [vmem:[#allocation2] sm:$0xff] %v14
  %31 = vst [vmem:[#allocation2 + $0x8] sm:$0xff] %v15
  %32 = vst [vmem:[#allocation2 + $0x10] sm:$0xff] %v16
  %33 = vst [vmem:[#allocation2 + $0x30] sm:$0xff] %v18
  %34 = vst [vmem:[#allocation2 + $0x38] sm:$0xff] %v19
  %35 = vst [vmem:[#allocation2 + $0x40] sm:$0xff] %v20
  %36 = vst [vmem:[#allocation2 + $0x60] sm:$0xff] %v22
  %37 = vst [vmem:[#allocation2 + $0x68] sm:$0xff] %v23
  %38 = vst [vmem:[#allocation2 + $0x70] sm:$0xff] %v24
  %39 = vst [vmem:[#allocation2 + $0x90] sm:$0xff] %v26
  %40 = vst [vmem:[#allocation2 + $0x98] sm:$0xff] %v27
  %41 = vst [vmem:[#allocation2 + $0xa0] sm:$0xff] %v28
  %58 = vrot.lane.b32.xlu0 %v14, 127
  %v59 = vpop.permute.xlu0 %58
  %60 = vrot.lane.b32.xlu0 %v15, 127
  %v61 = vpop.permute.xlu0 %60
  %62 = vrot.lane.b32.xlu0 %v16, 127
  %v63 = vpop.permute.xlu0 %62
  %64 = vrot.lane.b32.xlu0 %v17, 127
  %v65 = vpop.permute.xlu0 %64
  %66 = vrot.lane.b32.xlu0 %v18, 127
  %v67 = vpop.permute.xlu0 %66
  %68 = vrot.lane.b32.xlu0 %v19, 127
  %v69 = vpop.permute.xlu0 %68
  %70 = vrot.lane.b32.xlu0 %v20, 127
  %v71 = vpop.permute.xlu0 %70
  %72 = vrot.lane.b32.xlu0 %v21, 127
  %v73 = vpop.permute.xlu0 %72
  %74 = vrot.lane.b32.xlu0 %v22, 127
  %v75 = vpop.permute.xlu0 %74
  %76 = vrot.lane.b32.xlu0 %v23, 127
  %v77 = vpop.permute.xlu0 %76
  %78 = vrot.lane.b32.xlu0 %v24, 127
  %v79 = vpop.permute.xlu0 %78
  %80 = vrot.lane.b32.xlu0 %v25, 127
  %v81 = vpop.permute.xlu0 %80
  %82 = vrot.lane.b32.xlu0 %v26, 127
  %v83 = vpop.permute.xlu0 %82
  %84 = vrot.lane.b32.xlu0 %v27, 127
  %v85 = vpop.permute.xlu0 %84
  %86 = vrot.lane.b32.xlu0 %v28, 127
  %v87 = vpop.permute.xlu0 %86
  %88 = vrot.lane.b32.xlu0 %v29, 127
  %v89 = vpop.permute.xlu0 %88
  %vm90 = vcmask 1039360
  %v91 = vsel %vm90, %v59, %v61
  %v92 = vsel %vm90, %v61, %v63
  %v93 = vsel %vm90, %v63, %v65
  %v94 = vsel %vm90, %v67, %v69
  %v95 = vsel %vm90, %v69, %v71
  %v96 = vsel %vm90, %v71, %v73
  %v97 = vsel %vm90, %v75, %v77
  %v98 = vsel %vm90, %v77, %v79
  %v99 = vsel %vm90, %v79, %v81
  %v100 = vsel %vm90, %v83, %v85
  %v101 = vsel %vm90, %v85, %v87
  %v102 = vsel %vm90, %v87, %v89
  %115 = vst [vmem:[#allocation2 + $0xc0] sm:$0xff] %v91
  %116 = vst [vmem:[#allocation2 + $0xc8] sm:$0xff] %v92
  %117 = vst [vmem:[#allocation2 + $0xd0] sm:$0xff] %v93
  %118 = vst [vmem:[#allocation2 + $0xf0] sm:$0xff] %v94
  %119 = vst [vmem:[#allocation2 + $0xf8] sm:$0xff] %v95
  %120 = vst [vmem:[#allocation2 + $0x100] sm:$0xff] %v96
  %121 = vst [vmem:[#allocation2 + $0x120] sm:$0xff] %v97
  %122 = vst [vmem:[#allocation2 + $0x128] sm:$0xff] %v98
  %123 = vst [vmem:[#allocation2 + $0x130] sm:$0xff] %v99
  %124 = vst [vmem:[#allocation2 + $0x150] sm:$0xff] %v100
  %125 = vst [vmem:[#allocation2 + $0x158] sm:$0xff] %v101
  %126 = vst [vmem:[#allocation2 + $0x160] sm:$0xff] %v102
  %127 = vrot.lane.b32.xlu0 %v14, 126
  %v128 = vpop.permute.xlu0 %127
  %129 = vrot.lane.b32.xlu0 %v15, 126
  %v130 = vpop.permute.xlu0 %129
  %131 = vrot.lane.b32.xlu0 %v16, 126
  %v132 = vpop.permute.xlu0 %131
  %133 = vrot.lane.b32.xlu0 %v17, 126
  %v134 = vpop.permute.xlu0 %133
  %135 = vrot.lane.b32.xlu0 %v18, 126
  %v136 = vpop.permute.xlu0 %135
  %137 = vrot.lane.b32.xlu0 %v19, 126
  %v138 = vpop.permute.xlu0 %137
  %139 = vrot.lane.b32.xlu0 %v20, 126
  %v140 = vpop.permute.xlu0 %139
  %141 = vrot.lane.b32.xlu0 %v21, 126
  %v142 = vpop.permute.xlu0 %141
  %143 = vrot.lane.b32.xlu0 %v22, 126
  %v144 = vpop.permute.xlu0 %143
  %145 = vrot.lane.b32.xlu0 %v23, 126
  %v146 = vpop.permute.xlu0 %145
  %147 = vrot.lane.b32.xlu0 %v24, 126
  %v148 = vpop.permute.xlu0 %147
  %149 = vrot.lane.b32.xlu0 %v25, 126
  %v150 = vpop.permute.xlu0 %149
  %151 = vrot.lane.b32.xlu0 %v26, 126
  %v152 = vpop.permute.xlu0 %151
  %153 = vrot.lane.b32.xlu0 %v27, 126
  %v154 = vpop.permute.xlu0 %153
  %155 = vrot.lane.b32.xlu0 %v28, 126
  %v156 = vpop.permute.xlu0 %155
  %157 = vrot.lane.b32.xlu0 %v29, 126
  %v158 = vpop.permute.xlu0 %157
  %vm159 = vcmask 1031168
  %v160 = vsel %vm159, %v128, %v130
  %v161 = vsel %vm159, %v130, %v132
  %v162 = vsel %vm159, %v132, %v134
  %v163 = vsel %vm159, %v136, %v138
  %v164 = vsel %vm159, %v138, %v140
  %v165 = vsel %vm159, %v140, %v142
  %v166 = vsel %vm159, %v144, %v146
  %v167 = vsel %vm159, %v146, %v148
  %v168 = vsel %vm159, %v148, %v150
  %v169 = vsel %vm159, %v152, %v154
  %v170 = vsel %vm159, %v154, %v156
  %v171 = vsel %vm159, %v156, %v158
  %184 = vst [vmem:[#allocation2 + $0x180] sm:$0xff] %v160
  %185 = vst [vmem:[#allocation2 + $0x188] sm:$0xff] %v161
  %186 = vst [vmem:[#allocation2 + $0x190] sm:$0xff] %v162
  %187 = vst [vmem:[#allocation2 + $0x1b0] sm:$0xff] %v163
  %188 = vst [vmem:[#allocation2 + $0x1b8] sm:$0xff] %v164
  %189 = vst [vmem:[#allocation2 + $0x1c0] sm:$0xff] %v165
  %190 = vst [vmem:[#allocation2 + $0x1e0] sm:$0xff] %v166
  %191 = vst [vmem:[#allocation2 + $0x1e8] sm:$0xff] %v167
  %192 = vst [vmem:[#allocation2 + $0x1f0] sm:$0xff] %v168
  %193 = vst [vmem:[#allocation2 + $0x210] sm:$0xff] %v169
  %194 = vst [vmem:[#allocation2 + $0x218] sm:$0xff] %v170
  %195 = vst [vmem:[#allocation2 + $0x220] sm:$0xff] %v171
  %196 = vrot.lane.b32.xlu0 %v14, 110
  %v197 = vpop.permute.xlu0 %196
  %198 = vrot.lane.b32.xlu0 %v15, 110
  %v199 = vpop.permute.xlu0 %198
  %200 = vrot.lane.b32.xlu0 %v16, 110
  %v201 = vpop.permute.xlu0 %200
  %202 = vrot.lane.b32.xlu0 %v17, 110
  %v203 = vpop.permute.xlu0 %202
  %204 = vrot.lane.b32.xlu0 %v18, 110
  %v205 = vpop.permute.xlu0 %204
  %206 = vrot.lane.b32.xlu0 %v19, 110
  %v207 = vpop.permute.xlu0 %206
  %208 = vrot.lane.b32.xlu0 %v20, 110
  %v209 = vpop.permute.xlu0 %208
  %210 = vrot.lane.b32.xlu0 %v21, 110
  %v211 = vpop.permute.xlu0 %210
  %212 = vrot.lane.b32.xlu0 %v22, 110
  %v213 = vpop.permute.xlu0 %212
  %214 = vrot.lane.b32.xlu0 %v23, 110
  %v215 = vpop.permute.xlu0 %214
  %216 = vrot.lane.b32.xlu0 %v24, 110
  %v217 = vpop.permute.xlu0 %216
  %218 = vrot.lane.b32.xlu0 %v25, 110
  %v219 = vpop.permute.xlu0 %218
  %220 = vrot.lane.b32.xlu0 %v26, 110
  %v221 = vpop.permute.xlu0 %220
  %222 = vrot.lane.b32.xlu0 %v27, 110
  %v223 = vpop.permute.xlu0 %222
  %224 = vrot.lane.b32.xlu0 %v28, 110
  %v225 = vpop.permute.xlu0 %224
  %226 = vrot.lane.b32.xlu0 %v29, 110
  %v227 = vpop.permute.xlu0 %226
  %vm228 = vcmask 900096
  %v229 = vsel %vm228, %v197, %v199
  %v230 = vsel %vm228, %v199, %v201
  %v231 = vsel %vm228, %v201, %v203
  %v232 = vsel %vm228, %v205, %v207
  %v233 = vsel %vm228, %v207, %v209
  %v234 = vsel %vm228, %v209, %v211
  %v235 = vsel %vm228, %v213, %v215
  %v236 = vsel %vm228, %v215, %v217
  %v237 = vsel %vm228, %v217, %v219
  %v238 = vsel %vm228, %v221, %v223
  %v239 = vsel %vm228, %v223, %v225
  %v240 = vsel %vm228, %v225, %v227
  %253 = vst [vmem:[#allocation2 + $0x240] sm:$0xff] %v229
  %254 = vst [vmem:[#allocation2 + $0x248] sm:$0xff] %v230
  %255 = vst [vmem:[#allocation2 + $0x250] sm:$0xff] %v231
  %256 = vst [vmem:[#allocation2 + $0x270] sm:$0xff] %v232
  %257 = vst [vmem:[#allocation2 + $0x278] sm:$0xff] %v233
  %258 = vst [vmem:[#allocation2 + $0x280] sm:$0xff] %v234
  %259 = vst [vmem:[#allocation2 + $0x2a0] sm:$0xff] %v235
  %260 = vst [vmem:[#allocation2 + $0x2a8] sm:$0xff] %v236
  %261 = vst [vmem:[#allocation2 + $0x2b0] sm:$0xff] %v237
  %262 = vst [vmem:[#allocation2 + $0x2d0] sm:$0xff] %v238
  %263 = vst [vmem:[#allocation2 + $0x2d8] sm:$0xff] %v239
  %264 = vst [vmem:[#allocation2 + $0x2e0] sm:$0xff] %v240
  %265 = vrot.lane.b32.xlu0 %v14, 109
  %v266 = vpop.permute.xlu0 %265
  %267 = vrot.lane.b32.xlu0 %v15, 109
  %v268 = vpop.permute.xlu0 %267
  %269 = vrot.lane.b32.xlu0 %v16, 109
  %v270 = vpop.permute.xlu0 %269
  %271 = vrot.lane.b32.xlu0 %v17, 109
  %v272 = vpop.permute.xlu0 %271
  %273 = vrot.lane.b32.xlu0 %v18, 109
  %v274 = vpop.permute.xlu0 %273
  %275 = vrot.lane.b32.xlu0 %v19, 109
  %v276 = vpop.permute.xlu0 %275
  %277 = vrot.lane.b32.xlu0 %v20, 109
  %v278 = vpop.permute.xlu0 %277
  %279 = vrot.lane.b32.xlu0 %v21, 109
  %v280 = vpop.permute.xlu0 %279
  %281 = vrot.lane.b32.xlu0 %v22, 109
  %v282 = vpop.permute.xlu0 %281
  %283 = vrot.lane.b32.xlu0 %v23, 109
  %v284 = vpop.permute.xlu0 %283
  %285 = vrot.lane.b32.xlu0 %v24, 109
  %v286 = vpop.permute.xlu0 %285
  %287 = vrot.lane.b32.xlu0 %v25, 109
  %v288 = vpop.permute.xlu0 %287
  %289 = vrot.lane.b32.xlu0 %v26, 109
  %v290 = vpop.permute.xlu0 %289
  %291 = vrot.lane.b32.xlu0 %v27, 109
  %v292 = vpop.permute.xlu0 %291
  %293 = vrot.lane.b32.xlu0 %v28, 109
  %v294 = vpop.permute.xlu0 %293
  %295 = vrot.lane.b32.xlu0 %v29, 109
  %v296 = vpop.permute.xlu0 %295
  %vm297 = vcmask 891904
  %v298 = vsel %vm297, %v266, %v268
  %v299 = vsel %vm297, %v268, %v270
  %v300 = vsel %vm297, %v270, %v272
  %v301 = vsel %vm297, %v274, %v276
  %v302 = vsel %vm297, %v276, %v278
  %v303 = vsel %vm297, %v278, %v280
  %v304 = vsel %vm297, %v282, %v284
  %v305 = vsel %vm297, %v284, %v286
  %v306 = vsel %vm297, %v286, %v288
  %v307 = vsel %vm297, %v290, %v292
  %v308 = vsel %vm297, %v292, %v294
  %v309 = vsel %vm297, %v294, %v296
  %322 = vst [vmem:[#allocation2 + $0x300] sm:$0xff] %v298
  %323 = vst [vmem:[#allocation2 + $0x308] sm:$0xff] %v299
  %324 = vst [vmem:[#allocation2 + $0x310] sm:$0xff] %v300
  %325 = vst [vmem:[#allocation2 + $0x330] sm:$0xff] %v301
  %326 = vst [vmem:[#allocation2 + $0x338] sm:$0xff] %v302
  %327 = vst [vmem:[#allocation2 + $0x340] sm:$0xff] %v303
  %328 = vst [vmem:[#allocation2 + $0x360] sm:$0xff] %v304
  %329 = vst [vmem:[#allocation2 + $0x368] sm:$0xff] %v305
  %330 = vst [vmem:[#allocation2 + $0x370] sm:$0xff] %v306
  %331 = vst [vmem:[#allocation2 + $0x390] sm:$0xff] %v307
  %332 = vst [vmem:[#allocation2 + $0x398] sm:$0xff] %v308
  %333 = vst [vmem:[#allocation2 + $0x3a0] sm:$0xff] %v309
  %334 = vrot.lane.b32.xlu0 %v14, 108
  %v335 = vpop.permute.xlu0 %334
  %336 = vrot.lane.b32.xlu0 %v15, 108
  %v337 = vpop.permute.xlu0 %336
  %338 = vrot.lane.b32.xlu0 %v16, 108
  %v339 = vpop.permute.xlu0 %338
  %340 = vrot.lane.b32.xlu0 %v17, 108
  %v341 = vpop.permute.xlu0 %340
  %342 = vrot.lane.b32.xlu0 %v18, 108
  %v343 = vpop.permute.xlu0 %342
  %344 = vrot.lane.b32.xlu0 %v19, 108
  %v345 = vpop.permute.xlu0 %344
  %346 = vrot.lane.b32.xlu0 %v20, 108
  %v347 = vpop.permute.xlu0 %346
  %348 = vrot.lane.b32.xlu0 %v21, 108
  %v349 = vpop.permute.xlu0 %348
  %350 = vrot.lane.b32.xlu0 %v22, 108
  %v351 = vpop.permute.xlu0 %350
  %352 = vrot.lane.b32.xlu0 %v23, 108
  %v353 = vpop.permute.xlu0 %352
  %354 = vrot.lane.b32.xlu0 %v24, 108
  %v355 = vpop.permute.xlu0 %354
  %356 = vrot.lane.b32.xlu0 %v25, 108
  %v357 = vpop.permute.xlu0 %356
  %358 = vrot.lane.b32.xlu0 %v26, 108
  %v359 = vpop.permute.xlu0 %358
  %360 = vrot.lane.b32.xlu0 %v27, 108
  %v361 = vpop.permute.xlu0 %360
  %362 = vrot.lane.b32.xlu0 %v28, 108
  %v363 = vpop.permute.xlu0 %362
  %364 = vrot.lane.b32.xlu0 %v29, 108
  %v365 = vpop.permute.xlu0 %364
  %vm366 = vcmask 883712
  %v367 = vsel %vm366, %v335, %v337
  %v368 = vsel %vm366, %v337, %v339
  %v369 = vsel %vm366, %v339, %v341
  %v370 = vsel %vm366, %v343, %v345
  %v371 = vsel %vm366, %v345, %v347
  %v372 = vsel %vm366, %v347, %v349
  %v373 = vsel %vm366, %v351, %v353
  %v374 = vsel %vm366, %v353, %v355
  %v375 = vsel %vm366, %v355, %v357
  %v376 = vsel %vm366, %v359, %v361
  %v377 = vsel %vm366, %v361, %v363
  %v378 = vsel %vm366, %v363, %v365
  %391 = vst [vmem:[#allocation2 + $0x3c0] sm:$0xff] %v367
  %392 = vst [vmem:[#allocation2 + $0x3c8] sm:$0xff] %v368
  %393 = vst [vmem:[#allocation2 + $0x3d0] sm:$0xff] %v369
  %394 = vst [vmem:[#allocation2 + $0x3f0] sm:$0xff] %v370
  %395 = vst [vmem:[#allocation2 + $0x3f8] sm:$0xff] %v371
  %396 = vst [vmem:[#allocation2 + $0x400] sm:$0xff] %v372
  %397 = vst [vmem:[#allocation2 + $0x420] sm:$0xff] %v373
  %398 = vst [vmem:[#allocation2 + $0x428] sm:$0xff] %v374
  %399 = vst [vmem:[#allocation2 + $0x430] sm:$0xff] %v375
  %400 = vst [vmem:[#allocation2 + $0x450] sm:$0xff] %v376
  %401 = vst [vmem:[#allocation2 + $0x458] sm:$0xff] %v377
  %402 = vst [vmem:[#allocation2 + $0x460] sm:$0xff] %v378
  %403 = vrot.lane.b32.xlu0 %v14, 92
  %v404 = vpop.permute.xlu0 %403
  %405 = vrot.lane.b32.xlu0 %v15, 92
  %v406 = vpop.permute.xlu0 %405
  %407 = vrot.lane.b32.xlu0 %v16, 92
  %v408 = vpop.permute.xlu0 %407
  %409 = vrot.lane.b32.xlu0 %v17, 92
  %v410 = vpop.permute.xlu0 %409
  %411 = vrot.lane.b32.xlu0 %v18, 92
  %v412 = vpop.permute.xlu0 %411
  %413 = vrot.lane.b32.xlu0 %v19, 92
  %v414 = vpop.permute.xlu0 %413
  %415 = vrot.lane.b32.xlu0 %v20, 92
  %v416 = vpop.permute.xlu0 %415
  %417 = vrot.lane.b32.xlu0 %v21, 92
  %v418 = vpop.permute.xlu0 %417
  %419 = vrot.lane.b32.xlu0 %v22, 92
  %v420 = vpop.permute.xlu0 %419
  %421 = vrot.lane.b32.xlu0 %v23, 92
  %v422 = vpop.permute.xlu0 %421
  %423 = vrot.lane.b32.xlu0 %v24, 92
  %v424 = vpop.permute.xlu0 %423
  %425 = vrot.lane.b32.xlu0 %v25, 92
  %v426 = vpop.permute.xlu0 %425
  %427 = vrot.lane.b32.xlu0 %v26, 92
  %v428 = vpop.permute.xlu0 %427
  %429 = vrot.lane.b32.xlu0 %v27, 92
  %v430 = vpop.permute.xlu0 %429
  %431 = vrot.lane.b32.xlu0 %v28, 92
  %v432 = vpop.permute.xlu0 %431
  %433 = vrot.lane.b32.xlu0 %v29, 92
  %v434 = vpop.permute.xlu0 %433
  %vm435 = vcmask 752640
  %v436 = vsel %vm435, %v404, %v406
  %v437 = vsel %vm435, %v406, %v408
  %v438 = vsel %vm435, %v408, %v410
  %v439 = vsel %vm435, %v412, %v414
  %v440 = vsel %vm435, %v414, %v416
  %v441 = vsel %vm435, %v416, %v418
  %v442 = vsel %vm435, %v420, %v422
  %v443 = vsel %vm435, %v422, %v424
  %v444 = vsel %vm435, %v424, %v426
  %v445 = vsel %vm435, %v428, %v430
  %v446 = vsel %vm435, %v430, %v432
  %v447 = vsel %vm435, %v432, %v434
  %460 = vst [vmem:[#allocation2 + $0x480] sm:$0xff] %v436
  %461 = vst [vmem:[#allocation2 + $0x488] sm:$0xff] %v437
  %462 = vst [vmem:[#allocation2 + $0x490] sm:$0xff] %v438
  %463 = vst [vmem:[#allocation2 + $0x4b0] sm:$0xff] %v439
  %464 = vst [vmem:[#allocation2 + $0x4b8] sm:$0xff] %v440
  %465 = vst [vmem:[#allocation2 + $0x4c0] sm:$0xff] %v441
  %466 = vst [vmem:[#allocation2 + $0x4e0] sm:$0xff] %v442
  %467 = vst [vmem:[#allocation2 + $0x4e8] sm:$0xff] %v443
  %468 = vst [vmem:[#allocation2 + $0x4f0] sm:$0xff] %v444
  %469 = vst [vmem:[#allocation2 + $0x510] sm:$0xff] %v445
  %470 = vst [vmem:[#allocation2 + $0x518] sm:$0xff] %v446
  %471 = vst [vmem:[#allocation2 + $0x520] sm:$0xff] %v447
  %472 = vrot.lane.b32.xlu0 %v14, 91
  %v473 = vpop.permute.xlu0 %472
  %474 = vrot.lane.b32.xlu0 %v15, 91
  %v475 = vpop.permute.xlu0 %474
  %476 = vrot.lane.b32.xlu0 %v16, 91
  %v477 = vpop.permute.xlu0 %476
  %478 = vrot.lane.b32.xlu0 %v17, 91
  %v479 = vpop.permute.xlu0 %478
  %480 = vrot.lane.b32.xlu0 %v18, 91
  %v481 = vpop.permute.xlu0 %480
  %482 = vrot.lane.b32.xlu0 %v19, 91
  %v483 = vpop.permute.xlu0 %482
  %484 = vrot.lane.b32.xlu0 %v20, 91
  %v485 = vpop.permute.xlu0 %484
  %486 = vrot.lane.b32.xlu0 %v21, 91
  %v487 = vpop.permute.xlu0 %486
  %488 = vrot.lane.b32.xlu0 %v22, 91
  %v489 = vpop.permute.xlu0 %488
  %490 = vrot.lane.b32.xlu0 %v23, 91
  %v491 = vpop.permute.xlu0 %490
  %492 = vrot.lane.b32.xlu0 %v24, 91
  %v493 = vpop.permute.xlu0 %492
  %494 = vrot.lane.b32.xlu0 %v25, 91
  %v495 = vpop.permute.xlu0 %494
  %496 = vrot.lane.b32.xlu0 %v26, 91
  %v497 = vpop.permute.xlu0 %496
  %498 = vrot.lane.b32.xlu0 %v27, 91
  %v499 = vpop.permute.xlu0 %498
  %500 = vrot.lane.b32.xlu0 %v28, 91
  %v501 = vpop.permute.xlu0 %500
  %502 = vrot.lane.b32.xlu0 %v29, 91
  %v503 = vpop.permute.xlu0 %502
  %vm504 = vcmask 744448
  %v505 = vsel %vm504, %v473, %v475
  %v506 = vsel %vm504, %v475, %v477
  %v507 = vsel %vm504, %v477, %v479
  %v508 = vsel %vm504, %v481, %v483
  %v509 = vsel %vm504, %v483, %v485
  %v510 = vsel %vm504, %v485, %v487
  %v511 = vsel %vm504, %v489, %v491
  %v512 = vsel %vm504, %v491, %v493
  %v513 = vsel %vm504, %v493, %v495
  %v514 = vsel %vm504, %v497, %v499
  %v515 = vsel %vm504, %v499, %v501
  %v516 = vsel %vm504, %v501, %v503
  %529 = vst [vmem:[#allocation2 + $0x540] sm:$0xff] %v505
  %530 = vst [vmem:[#allocation2 + $0x548] sm:$0xff] %v506
  %531 = vst [vmem:[#allocation2 + $0x550] sm:$0xff] %v507
  %532 = vst [vmem:[#allocation2 + $0x570] sm:$0xff] %v508
  %533 = vst [vmem:[#allocation2 + $0x578] sm:$0xff] %v509
  %534 = vst [vmem:[#allocation2 + $0x580] sm:$0xff] %v510
  %535 = vst [vmem:[#allocation2 + $0x5a0] sm:$0xff] %v511
  %536 = vst [vmem:[#allocation2 + $0x5a8] sm:$0xff] %v512
  %537 = vst [vmem:[#allocation2 + $0x5b0] sm:$0xff] %v513
  %538 = vst [vmem:[#allocation2 + $0x5d0] sm:$0xff] %v514
  %539 = vst [vmem:[#allocation2 + $0x5d8] sm:$0xff] %v515
  %540 = vst [vmem:[#allocation2 + $0x5e0] sm:$0xff] %v516
  %541 = vrot.lane.b32.xlu0 %v14, 90
  %v542 = vpop.permute.xlu0 %541
  %543 = vrot.lane.b32.xlu0 %v15, 90
  %v544 = vpop.permute.xlu0 %543
  %545 = vrot.lane.b32.xlu0 %v16, 90
  %v546 = vpop.permute.xlu0 %545
  %547 = vrot.lane.b32.xlu0 %v17, 90
  %v548 = vpop.permute.xlu0 %547
  %549 = vrot.lane.b32.xlu0 %v18, 90
  %v550 = vpop.permute.xlu0 %549
  %551 = vrot.lane.b32.xlu0 %v19, 90
  %v552 = vpop.permute.xlu0 %551
  %553 = vrot.lane.b32.xlu0 %v20, 90
  %v554 = vpop.permute.xlu0 %553
  %555 = vrot.lane.b32.xlu0 %v21, 90
  %v556 = vpop.permute.xlu0 %555
  %557 = vrot.lane.b32.xlu0 %v22, 90
  %v558 = vpop.permute.xlu0 %557
  %559 = vrot.lane.b32.xlu0 %v23, 90
  %v560 = vpop.permute.xlu0 %559
  %561 = vrot.lane.b32.xlu0 %v24, 90
  %v562 = vpop.permute.xlu0 %561
  %563 = vrot.lane.b32.xlu0 %v25, 90
  %v564 = vpop.permute.xlu0 %563
  %565 = vrot.lane.b32.xlu0 %v26, 90
  %v566 = vpop.permute.xlu0 %565
  %567 = vrot.lane.b32.xlu0 %v27, 90
  %v568 = vpop.permute.xlu0 %567
  %569 = vrot.lane.b32.xlu0 %v28, 90
  %v570 = vpop.permute.xlu0 %569
  %571 = vrot.lane.b32.xlu0 %v29, 90
  %v572 = vpop.permute.xlu0 %571
  %vm573 = vcmask 736256
  %v574 = vsel %vm573, %v542, %v544
  %v575 = vsel %vm573, %v544, %v546
  %v576 = vsel %vm573, %v546, %v548
  %v577 = vsel %vm573, %v550, %v552
  %v578 = vsel %vm573, %v552, %v554
  %v579 = vsel %vm573, %v554, %v556
  %v580 = vsel %vm573, %v558, %v560
  %v581 = vsel %vm573, %v560, %v562
  %v582 = vsel %vm573, %v562, %v564
  %v583 = vsel %vm573, %v566, %v568
  %v584 = vsel %vm573, %v568, %v570
  %v585 = vsel %vm573, %v570, %v572
  %598 = vst [vmem:[#allocation2 + $0x600] sm:$0xff] %v574
  %599 = vst [vmem:[#allocation2 + $0x608] sm:$0xff] %v575
  %600 = vst [vmem:[#allocation2 + $0x610] sm:$0xff] %v576
  %601 = vst [vmem:[#allocation2 + $0x630] sm:$0xff] %v577
  %602 = vst [vmem:[#allocation2 + $0x638] sm:$0xff] %v578
  %603 = vst [vmem:[#allocation2 + $0x640] sm:$0xff] %v579
  %604 = vst [vmem:[#allocation2 + $0x660] sm:$0xff] %v580
  %605 = vst [vmem:[#allocation2 + $0x668] sm:$0xff] %v581
  %606 = vst [vmem:[#allocation2 + $0x670] sm:$0xff] %v582
  %607 = vst [vmem:[#allocation2 + $0x690] sm:$0xff] %v583
  %608 = vst [vmem:[#allocation2 + $0x698] sm:$0xff] %v584
  %609 = vst [vmem:[#allocation2 + $0x6a0] sm:$0xff] %v585
  %s610 = scalar_lea.vmem %s0, 128
  %v611 = vld [vmem:[%s610] sm:$0xff]
  %v612 = vld [vmem:[%s610 + $0x8] sm:$0xff]
  %v613 = vld [vmem:[%s610 + $0x10] sm:$0xff]
  %v614 = vld [vmem:[%s610 + $0x18] sm:$0xff]
  %v615 = vld [vmem:[%s610 + $0x20] sm:$0xff]
  %v616 = vld [vmem:[%s610 + $0x28] sm:$0xff]
  %v617 = vld [vmem:[%s610 + $0x30] sm:$0xff]
  %v618 = vld [vmem:[%s610 + $0x38] sm:$0xff]
  %v619 = vld [vmem:[%s610 + $0x40] sm:$0xff]
  %v620 = vld [vmem:[%s610 + $0x48] sm:$0xff]
  %v621 = vld [vmem:[%s610 + $0x50] sm:$0xff]
  %v622 = vld [vmem:[%s610 + $0x58] sm:$0xff]
  %v623 = vld [vmem:[%s610 + $0x60] sm:$0xff]
  %v624 = vld [vmem:[%s610 + $0x68] sm:$0xff]
  %v625 = vld [vmem:[%s610 + $0x70] sm:$0xff]
  %v626 = vld [vmem:[%s610 + $0x78] sm:$0xff]
  %627 = vst [vmem:[#allocation2 + $0x18] sm:$0xff] %v611
  %628 = vst [vmem:[#allocation2 + $0x20] sm:$0xff] %v612
  %629 = vst [vmem:[#allocation2 + $0x28] sm:$0xff] %v613
  %630 = vst [vmem:[#allocation2 + $0x48] sm:$0xff] %v615
  %631 = vst [vmem:[#allocation2 + $0x50] sm:$0xff] %v616
  %632 = vst [vmem:[#allocation2 + $0x58] sm:$0xff] %v617
  %633 = vst [vmem:[#allocation2 + $0x78] sm:$0xff] %v619
  %634 = vst [vmem:[#allocation2 + $0x80] sm:$0xff] %v620
  %635 = vst [vmem:[#allocation2 + $0x88] sm:$0xff] %v621
  %636 = vst [vmem:[#allocation2 + $0xa8] sm:$0xff] %v623
  %637 = vst [vmem:[#allocation2 + $0xb0] sm:$0xff] %v624
  %638 = vst [vmem:[#allocation2 + $0xb8] sm:$0xff] %v625
  %655 = vrot.lane.b32.xlu0 %v611, 127
  %v656 = vpop.permute.xlu0 %655
  %657 = vrot.lane.b32.xlu0 %v612, 127
  %v658 = vpop.permute.xlu0 %657
  %659 = vrot.lane.b32.xlu0 %v613, 127
  %v660 = vpop.permute.xlu0 %659
  %661 = vrot.lane.b32.xlu0 %v614, 127
  %v662 = vpop.permute.xlu0 %661
  %663 = vrot.lane.b32.xlu0 %v615, 127
  %v664 = vpop.permute.xlu0 %663
  %665 = vrot.lane.b32.xlu0 %v616, 127
  %v666 = vpop.permute.xlu0 %665
  %667 = vrot.lane.b32.xlu0 %v617, 127
  %v668 = vpop.permute.xlu0 %667
  %669 = vrot.lane.b32.xlu0 %v618, 127
  %v670 = vpop.permute.xlu0 %669
  %671 = vrot.lane.b32.xlu0 %v619, 127
  %v672 = vpop.permute.xlu0 %671
  %673 = vrot.lane.b32.xlu0 %v620, 127
  %v674 = vpop.permute.xlu0 %673
  %675 = vrot.lane.b32.xlu0 %v621, 127
  %v676 = vpop.permute.xlu0 %675
  %677 = vrot.lane.b32.xlu0 %v622, 127
  %v678 = vpop.permute.xlu0 %677
  %679 = vrot.lane.b32.xlu0 %v623, 127
  %v680 = vpop.permute.xlu0 %679
  %681 = vrot.lane.b32.xlu0 %v624, 127
  %v682 = vpop.permute.xlu0 %681
  %683 = vrot.lane.b32.xlu0 %v625, 127
  %v684 = vpop.permute.xlu0 %683
  %685 = vrot.lane.b32.xlu0 %v626, 127
  %v686 = vpop.permute.xlu0 %685
  %v687 = vsel %vm90, %v656, %v658
  %v688 = vsel %vm90, %v658, %v660
  %v689 = vsel %vm90, %v660, %v662
  %v690 = vsel %vm90, %v664, %v666
  %v691 = vsel %vm90, %v666, %v668
  %v692 = vsel %vm90, %v668, %v670
  %v693 = vsel %vm90, %v672, %v674
  %v694 = vsel %vm90, %v674, %v676
  %v695 = vsel %vm90, %v676, %v678
  %v696 = vsel %vm90, %v680, %v682
  %v697 = vsel %vm90, %v682, %v684
  %v698 = vsel %vm90, %v684, %v686
  %711 = vst [vmem:[#allocation2 + $0xd8] sm:$0xff] %v687
  %712 = vst [vmem:[#allocation2 + $0xe0] sm:$0xff] %v688
  %713 = vst [vmem:[#allocation2 + $0xe8] sm:$0xff] %v689
  %714 = vst [vmem:[#allocation2 + $0x108] sm:$0xff] %v690
  %715 = vst [vmem:[#allocation2 + $0x110] sm:$0xff] %v691
  %716 = vst [vmem:[#allocation2 + $0x118] sm:$0xff] %v692
  %717 = vst [vmem:[#allocation2 + $0x138] sm:$0xff] %v693
  %718 = vst [vmem:[#allocation2 + $0x140] sm:$0xff] %v694
  %719 = vst [vmem:[#allocation2 + $0x148] sm:$0xff] %v695
  %720 = vst [vmem:[#allocation2 + $0x168] sm:$0xff] %v696
  %721 = vst [vmem:[#allocation2 + $0x170] sm:$0xff] %v697
  %722 = vst [vmem:[#allocation2 + $0x178] sm:$0xff] %v698
  %723 = vrot.lane.b32.xlu0 %v611, 126
  %v724 = vpop.permute.xlu0 %723
  %725 = vrot.lane.b32.xlu0 %v612, 126
  %v726 = vpop.permute.xlu0 %725
  %727 = vrot.lane.b32.xlu0 %v613, 126
  %v728 = vpop.permute.xlu0 %727
  %729 = vrot.lane.b32.xlu0 %v614, 126
  %v730 = vpop.permute.xlu0 %729
  %731 = vrot.lane.b32.xlu0 %v615, 126
  %v732 = vpop.permute.xlu0 %731
  %733 = vrot.lane.b32.xlu0 %v616, 126
  %v734 = vpop.permute.xlu0 %733
  %735 = vrot.lane.b32.xlu0 %v617, 126
  %v736 = vpop.permute.xlu0 %735
  %737 = vrot.lane.b32.xlu0 %v618, 126
  %v738 = vpop.permute.xlu0 %737
  %739 = vrot.lane.b32.xlu0 %v619, 126
  %v740 = vpop.permute.xlu0 %739
  %741 = vrot.lane.b32.xlu0 %v620, 126
  %v742 = vpop.permute.xlu0 %741
  %743 = vrot.lane.b32.xlu0 %v621, 126
  %v744 = vpop.permute.xlu0 %743
  %745 = vrot.lane.b32.xlu0 %v622, 126
  %v746 = vpop.permute.xlu0 %745
  %747 = vrot.lane.b32.xlu0 %v623, 126
  %v748 = vpop.permute.xlu0 %747
  %749 = vrot.lane.b32.xlu0 %v624, 126
  %v750 = vpop.permute.xlu0 %749
  %751 = vrot.lane.b32.xlu0 %v625, 126
  %v752 = vpop.permute.xlu0 %751
  %753 = vrot.lane.b32.xlu0 %v626, 126
  %v754 = vpop.permute.xlu0 %753
  %v755 = vsel %vm159, %v724, %v726
  %v756 = vsel %vm159, %v726, %v728
  %v757 = vsel %vm159, %v728, %v730
  %v758 = vsel %vm159, %v732, %v734
  %v759 = vsel %vm159, %v734, %v736
  %v760 = vsel %vm159, %v736, %v738
  %v761 = vsel %vm159, %v740, %v742
  %v762 = vsel %vm159, %v742, %v744
  %v763 = vsel %vm159, %v744, %v746
  %v764 = vsel %vm159, %v748, %v750
  %v765 = vsel %vm159, %v750, %v752
  %v766 = vsel %vm159, %v752, %v754
  %779 = vst [vmem:[#allocation2 + $0x198] sm:$0xff] %v755
  %780 = vst [vmem:[#allocation2 + $0x1a0] sm:$0xff] %v756
  %781 = vst [vmem:[#allocation2 + $0x1a8] sm:$0xff] %v757
  %782 = vst [vmem:[#allocation2 + $0x1c8] sm:$0xff] %v758
  %783 = vst [vmem:[#allocation2 + $0x1d0] sm:$0xff] %v759
  %784 = vst [vmem:[#allocation2 + $0x1d8] sm:$0xff] %v760
  %785 = vst [vmem:[#allocation2 + $0x1f8] sm:$0xff] %v761
  %786 = vst [vmem:[#allocation2 + $0x200] sm:$0xff] %v762
  %787 = vst [vmem:[#allocation2 + $0x208] sm:$0xff] %v763
  %788 = vst [vmem:[#allocation2 + $0x228] sm:$0xff] %v764
  %789 = vst [vmem:[#allocation2 + $0x230] sm:$0xff] %v765
  %790 = vst [vmem:[#allocation2 + $0x238] sm:$0xff] %v766
  %791 = vrot.lane.b32.xlu0 %v611, 110
  %v792 = vpop.permute.xlu0 %791
  %793 = vrot.lane.b32.xlu0 %v612, 110
  %v794 = vpop.permute.xlu0 %793
  %795 = vrot.lane.b32.xlu0 %v613, 110
  %v796 = vpop.permute.xlu0 %795
  %797 = vrot.lane.b32.xlu0 %v614, 110
  %v798 = vpop.permute.xlu0 %797
  %799 = vrot.lane.b32.xlu0 %v615, 110
  %v800 = vpop.permute.xlu0 %799
  %801 = vrot.lane.b32.xlu0 %v616, 110
  %v802 = vpop.permute.xlu0 %801
  %803 = vrot.lane.b32.xlu0 %v617, 110
  %v804 = vpop.permute.xlu0 %803
  %805 = vrot.lane.b32.xlu0 %v618, 110
  %v806 = vpop.permute.xlu0 %805
  %807 = vrot.lane.b32.xlu0 %v619, 110
  %v808 = vpop.permute.xlu0 %807
  %809 = vrot.lane.b32.xlu0 %v620, 110
  %v810 = vpop.permute.xlu0 %809
  %811 = vrot.lane.b32.xlu0 %v621, 110
  %v812 = vpop.permute.xlu0 %811
  %813 = vrot.lane.b32.xlu0 %v622, 110
  %v814 = vpop.permute.xlu0 %813
  %815 = vrot.lane.b32.xlu0 %v623, 110
  %v816 = vpop.permute.xlu0 %815
  %817 = vrot.lane.b32.xlu0 %v624, 110
  %v818 = vpop.permute.xlu0 %817
  %819 = vrot.lane.b32.xlu0 %v625, 110
  %v820 = vpop.permute.xlu0 %819
  %821 = vrot.lane.b32.xlu0 %v626, 110
  %v822 = vpop.permute.xlu0 %821
  %v823 = vsel %vm228, %v792, %v794
  %v824 = vsel %vm228, %v794, %v796
  %v825 = vsel %vm228, %v796, %v798
  %v826 = vsel %vm228, %v800, %v802
  %v827 = vsel %vm228, %v802, %v804
  %v828 = vsel %vm228, %v804, %v806
  %v829 = vsel %vm228, %v808, %v810
  %v830 = vsel %vm228, %v810, %v812
  %v831 = vsel %vm228, %v812, %v814
  %v832 = vsel %vm228, %v816, %v818
  %v833 = vsel %vm228, %v818, %v820
  %v834 = vsel %vm228, %v820, %v822
  %847 = vst [vmem:[#allocation2 + $0x258] sm:$0xff] %v823
  %848 = vst [vmem:[#allocation2 + $0x260] sm:$0xff] %v824
  %849 = vst [vmem:[#allocation2 + $0x268] sm:$0xff] %v825
  %850 = vst [vmem:[#allocation2 + $0x288] sm:$0xff] %v826
  %851 = vst [vmem:[#allocation2 + $0x290] sm:$0xff] %v827
  %852 = vst [vmem:[#allocation2 + $0x298] sm:$0xff] %v828
  %853 = vst [vmem:[#allocation2 + $0x2b8] sm:$0xff] %v829
  %854 = vst [vmem:[#allocation2 + $0x2c0] sm:$0xff] %v830
  %855 = vst [vmem:[#allocation2 + $0x2c8] sm:$0xff] %v831
  %856 = vst [vmem:[#allocation2 + $0x2e8] sm:$0xff] %v832
  %857 = vst [vmem:[#allocation2 + $0x2f0] sm:$0xff] %v833
  %858 = vst [vmem:[#allocation2 + $0x2f8] sm:$0xff] %v834
  %859 = vrot.lane.b32.xlu0 %v611, 109
  %v860 = vpop.permute.xlu0 %859
  %861 = vrot.lane.b32.xlu0 %v612, 109
  %v862 = vpop.permute.xlu0 %861
  %863 = vrot.lane.b32.xlu0 %v613, 109
  %v864 = vpop.permute.xlu0 %863
  %865 = vrot.lane.b32.xlu0 %v614, 109
  %v866 = vpop.permute.xlu0 %865
  %867 = vrot.lane.b32.xlu0 %v615, 109
  %v868 = vpop.permute.xlu0 %867
  %869 = vrot.lane.b32.xlu0 %v616, 109
  %v870 = vpop.permute.xlu0 %869
  %871 = vrot.lane.b32.xlu0 %v617, 109
  %v872 = vpop.permute.xlu0 %871
  %873 = vrot.lane.b32.xlu0 %v618, 109
  %v874 = vpop.permute.xlu0 %873
  %875 = vrot.lane.b32.xlu0 %v619, 109
  %v876 = vpop.permute.xlu0 %875
  %877 = vrot.lane.b32.xlu0 %v620, 109
  %v878 = vpop.permute.xlu0 %877
  %879 = vrot.lane.b32.xlu0 %v621, 109
  %v880 = vpop.permute.xlu0 %879
  %881 = vrot.lane.b32.xlu0 %v622, 109
  %v882 = vpop.permute.xlu0 %881
  %883 = vrot.lane.b32.xlu0 %v623, 109
  %v884 = vpop.permute.xlu0 %883
  %885 = vrot.lane.b32.xlu0 %v624, 109
  %v886 = vpop.permute.xlu0 %885
  %887 = vrot.lane.b32.xlu0 %v625, 109
  %v888 = vpop.permute.xlu0 %887
  %889 = vrot.lane.b32.xlu0 %v626, 109
  %v890 = vpop.permute.xlu0 %889
  %v891 = vsel %vm297, %v860, %v862
  %v892 = vsel %vm297, %v862, %v864
  %v893 = vsel %vm297, %v864, %v866
  %v894 = vsel %vm297, %v868, %v870
  %v895 = vsel %vm297, %v870, %v872
  %v896 = vsel %vm297, %v872, %v874
  %v897 = vsel %vm297, %v876, %v878
  %v898 = vsel %vm297, %v878, %v880
  %v899 = vsel %vm297, %v880, %v882
  %v900 = vsel %vm297, %v884, %v886
  %v901 = vsel %vm297, %v886, %v888
  %v902 = vsel %vm297, %v888, %v890
  %915 = vst [vmem:[#allocation2 + $0x318] sm:$0xff] %v891
  %916 = vst [vmem:[#allocation2 + $0x320] sm:$0xff] %v892
  %917 = vst [vmem:[#allocation2 + $0x328] sm:$0xff] %v893
  %918 = vst [vmem:[#allocation2 + $0x348] sm:$0xff] %v894
  %919 = vst [vmem:[#allocation2 + $0x350] sm:$0xff] %v895
  %920 = vst [vmem:[#allocation2 + $0x358] sm:$0xff] %v896
  %921 = vst [vmem:[#allocation2 + $0x378] sm:$0xff] %v897
  %922 = vst [vmem:[#allocation2 + $0x380] sm:$0xff] %v898
  %923 = vst [vmem:[#allocation2 + $0x388] sm:$0xff] %v899
  %924 = vst [vmem:[#allocation2 + $0x3a8] sm:$0xff] %v900
  %925 = vst [vmem:[#allocation2 + $0x3b0] sm:$0xff] %v901
  %926 = vst [vmem:[#allocation2 + $0x3b8] sm:$0xff] %v902
  %927 = vrot.lane.b32.xlu0 %v611, 108
  %v928 = vpop.permute.xlu0 %927
  %929 = vrot.lane.b32.xlu0 %v612, 108
  %v930 = vpop.permute.xlu0 %929
  %931 = vrot.lane.b32.xlu0 %v613, 108
  %v932 = vpop.permute.xlu0 %931
  %933 = vrot.lane.b32.xlu0 %v614, 108
  %v934 = vpop.permute.xlu0 %933
  %935 = vrot.lane.b32.xlu0 %v615, 108
  %v936 = vpop.permute.xlu0 %935
  %937 = vrot.lane.b32.xlu0 %v616, 108
  %v938 = vpop.permute.xlu0 %937
  %939 = vrot.lane.b32.xlu0 %v617, 108
  %v940 = vpop.permute.xlu0 %939
  %941 = vrot.lane.b32.xlu0 %v618, 108
  %v942 = vpop.permute.xlu0 %941
  %943 = vrot.lane.b32.xlu0 %v619, 108
  %v944 = vpop.permute.xlu0 %943
  %945 = vrot.lane.b32.xlu0 %v620, 108
  %v946 = vpop.permute.xlu0 %945
  %947 = vrot.lane.b32.xlu0 %v621, 108
  %v948 = vpop.permute.xlu0 %947
  %949 = vrot.lane.b32.xlu0 %v622, 108
  %v950 = vpop.permute.xlu0 %949
  %951 = vrot.lane.b32.xlu0 %v623, 108
  %v952 = vpop.permute.xlu0 %951
  %953 = vrot.lane.b32.xlu0 %v624, 108
  %v954 = vpop.permute.xlu0 %953
  %955 = vrot.lane.b32.xlu0 %v625, 108
  %v956 = vpop.permute.xlu0 %955
  %957 = vrot.lane.b32.xlu0 %v626, 108
  %v958 = vpop.permute.xlu0 %957
  %v959 = vsel %vm366, %v928, %v930
  %v960 = vsel %vm366, %v930, %v932
  %v961 = vsel %vm366, %v932, %v934
  %v962 = vsel %vm366, %v936, %v938
  %v963 = vsel %vm366, %v938, %v940
  %v964 = vsel %vm366, %v940, %v942
  %v965 = vsel %vm366, %v944, %v946
  %v966 = vsel %vm366, %v946, %v948
  %v967 = vsel %vm366, %v948, %v950
  %v968 = vsel %vm366, %v952, %v954
  %v969 = vsel %vm366, %v954, %v956
  %v970 = vsel %vm366, %v956, %v958
  %983 = vst [vmem:[#allocation2 + $0x3d8] sm:$0xff] %v959
  %984 = vst [vmem:[#allocation2 + $0x3e0] sm:$0xff] %v960
  %985 = vst [vmem:[#allocation2 + $0x3e8] sm:$0xff] %v961
  %986 = vst [vmem:[#allocation2 + $0x408] sm:$0xff] %v962
  %987 = vst [vmem:[#allocation2 + $0x410] sm:$0xff] %v963
  %988 = vst [vmem:[#allocation2 + $0x418] sm:$0xff] %v964
  %989 = vst [vmem:[#allocation2 + $0x438] sm:$0xff] %v965
  %990 = vst [vmem:[#allocation2 + $0x440] sm:$0xff] %v966
  %991 = vst [vmem:[#allocation2 + $0x448] sm:$0xff] %v967
  %992 = vst [vmem:[#allocation2 + $0x468] sm:$0xff] %v968
  %993 = vst [vmem:[#allocation2 + $0x470] sm:$0xff] %v969
  %994 = vst [vmem:[#allocation2 + $0x478] sm:$0xff] %v970
  %995 = vrot.lane.b32.xlu0 %v611, 92
  %v996 = vpop.permute.xlu0 %995
  %997 = vrot.lane.b32.xlu0 %v612, 92
  %v998 = vpop.permute.xlu0 %997
  %999 = vrot.lane.b32.xlu0 %v613, 92
  %v1000 = vpop.permute.xlu0 %999
  %1001 = vrot.lane.b32.xlu0 %v614, 92
  %v1002 = vpop.permute.xlu0 %1001
  %1003 = vrot.lane.b32.xlu0 %v615, 92
  %v1004 = vpop.permute.xlu0 %1003
  %1005 = vrot.lane.b32.xlu0 %v616, 92
  %v1006 = vpop.permute.xlu0 %1005
  %1007 = vrot.lane.b32.xlu0 %v617, 92
  %v1008 = vpop.permute.xlu0 %1007
  %1009 = vrot.lane.b32.xlu0 %v618, 92
  %v1010 = vpop.permute.xlu0 %1009
  %1011 = vrot.lane.b32.xlu0 %v619, 92
  %v1012 = vpop.permute.xlu0 %1011
  %1013 = vrot.lane.b32.xlu0 %v620, 92
  %v1014 = vpop.permute.xlu0 %1013
  %1015 = vrot.lane.b32.xlu0 %v621, 92
  %v1016 = vpop.permute.xlu0 %1015
  %1017 = vrot.lane.b32.xlu0 %v622, 92
  %v1018 = vpop.permute.xlu0 %1017
  %1019 = vrot.lane.b32.xlu0 %v623, 92
  %v1020 = vpop.permute.xlu0 %1019
  %1021 = vrot.lane.b32.xlu0 %v624, 92
  %v1022 = vpop.permute.xlu0 %1021
  %1023 = vrot.lane.b32.xlu0 %v625, 92
  %v1024 = vpop.permute.xlu0 %1023
  %1025 = vrot.lane.b32.xlu0 %v626, 92
  %v1026 = vpop.permute.xlu0 %1025
  %v1027 = vsel %vm435, %v996, %v998
  %v1028 = vsel %vm435, %v998, %v1000
  %v1029 = vsel %vm435, %v1000, %v1002
  %v1030 = vsel %vm435, %v1004, %v1006
  %v1031 = vsel %vm435, %v1006, %v1008
  %v1032 = vsel %vm435, %v1008, %v1010
  %v1033 = vsel %vm435, %v1012, %v1014
  %v1034 = vsel %vm435, %v1014, %v1016
  %v1035 = vsel %vm435, %v1016, %v1018
  %v1036 = vsel %vm435, %v1020, %v1022
  %v1037 = vsel %vm435, %v1022, %v1024
  %v1038 = vsel %vm435, %v1024, %v1026
  %1051 = vst [vmem:[#allocation2 + $0x498] sm:$0xff] %v1027
  %1052 = vst [vmem:[#allocation2 + $0x4a0] sm:$0xff] %v1028
  %1053 = vst [vmem:[#allocation2 + $0x4a8] sm:$0xff] %v1029
  %1054 = vst [vmem:[#allocation2 + $0x4c8] sm:$0xff] %v1030
  %1055 = vst [vmem:[#allocation2 + $0x4d0] sm:$0xff] %v1031
  %1056 = vst [vmem:[#allocation2 + $0x4d8] sm:$0xff] %v1032
  %1057 = vst [vmem:[#allocation2 + $0x4f8] sm:$0xff] %v1033
  %1058 = vst [vmem:[#allocation2 + $0x500] sm:$0xff] %v1034
  %1059 = vst [vmem:[#allocation2 + $0x508] sm:$0xff] %v1035
  %1060 = vst [vmem:[#allocation2 + $0x528] sm:$0xff] %v1036
  %1061 = vst [vmem:[#allocation2 + $0x530] sm:$0xff] %v1037
  %1062 = vst [vmem:[#allocation2 + $0x538] sm:$0xff] %v1038
  %1063 = vrot.lane.b32.xlu0 %v611, 91
  %v1064 = vpop.permute.xlu0 %1063
  %1065 = vrot.lane.b32.xlu0 %v612, 91
  %v1066 = vpop.permute.xlu0 %1065
  %1067 = vrot.lane.b32.xlu0 %v613, 91
  %v1068 = vpop.permute.xlu0 %1067
  %1069 = vrot.lane.b32.xlu0 %v614, 91
  %v1070 = vpop.permute.xlu0 %1069
  %1071 = vrot.lane.b32.xlu0 %v615, 91
  %v1072 = vpop.permute.xlu0 %1071
  %1073 = vrot.lane.b32.xlu0 %v616, 91
  %v1074 = vpop.permute.xlu0 %1073
  %1075 = vrot.lane.b32.xlu0 %v617, 91
  %v1076 = vpop.permute.xlu0 %1075
  %1077 = vrot.lane.b32.xlu0 %v618, 91
  %v1078 = vpop.permute.xlu0 %1077
  %1079 = vrot.lane.b32.xlu0 %v619, 91
  %v1080 = vpop.permute.xlu0 %1079
  %1081 = vrot.lane.b32.xlu0 %v620, 91
  %v1082 = vpop.permute.xlu0 %1081
  %1083 = vrot.lane.b32.xlu0 %v621, 91
  %v1084 = vpop.permute.xlu0 %1083
  %1085 = vrot.lane.b32.xlu0 %v622, 91
  %v1086 = vpop.permute.xlu0 %1085
  %1087 = vrot.lane.b32.xlu0 %v623, 91
  %v1088 = vpop.permute.xlu0 %1087
  %1089 = vrot.lane.b32.xlu0 %v624, 91
  %v1090 = vpop.permute.xlu0 %1089
  %1091 = vrot.lane.b32.xlu0 %v625, 91
  %v1092 = vpop.permute.xlu0 %1091
  %1093 = vrot.lane.b32.xlu0 %v626, 91
  %v1094 = vpop.permute.xlu0 %1093
  %v1095 = vsel %vm504, %v1064, %v1066
  %v1096 = vsel %vm504, %v1066, %v1068
  %v1097 = vsel %vm504, %v1068, %v1070
  %v1098 = vsel %vm504, %v1072, %v1074
  %v1099 = vsel %vm504, %v1074, %v1076
  %v1100 = vsel %vm504, %v1076, %v1078
  %v1101 = vsel %vm504, %v1080, %v1082
  %v1102 = vsel %vm504, %v1082, %v1084
  %v1103 = vsel %vm504, %v1084, %v1086
  %v1104 = vsel %vm504, %v1088, %v1090
  %v1105 = vsel %vm504, %v1090, %v1092
  %v1106 = vsel %vm504, %v1092, %v1094
  %1119 = vst [vmem:[#allocation2 + $0x558] sm:$0xff] %v1095
  %1120 = vst [vmem:[#allocation2 + $0x560] sm:$0xff] %v1096
  %1121 = vst [vmem:[#allocation2 + $0x568] sm:$0xff] %v1097
  %1122 = vst [vmem:[#allocation2 + $0x588] sm:$0xff] %v1098
  %1123 = vst [vmem:[#allocation2 + $0x590] sm:$0xff] %v1099
  %1124 = vst [vmem:[#allocation2 + $0x598] sm:$0xff] %v1100
  %1125 = vst [vmem:[#allocation2 + $0x5b8] sm:$0xff] %v1101
  %1126 = vst [vmem:[#allocation2 + $0x5c0] sm:$0xff] %v1102
  %1127 = vst [vmem:[#allocation2 + $0x5c8] sm:$0xff] %v1103
  %1128 = vst [vmem:[#allocation2 + $0x5e8] sm:$0xff] %v1104
  %1129 = vst [vmem:[#allocation2 + $0x5f0] sm:$0xff] %v1105
  %1130 = vst [vmem:[#allocation2 + $0x5f8] sm:$0xff] %v1106
  %1131 = vrot.lane.b32.xlu0 %v611, 90
  %v1132 = vpop.permute.xlu0 %1131
  %1133 = vrot.lane.b32.xlu0 %v612, 90
  %v1134 = vpop.permute.xlu0 %1133
  %1135 = vrot.lane.b32.xlu0 %v613, 90
  %v1136 = vpop.permute.xlu0 %1135
  %1137 = vrot.lane.b32.xlu0 %v614, 90
  %v1138 = vpop.permute.xlu0 %1137
  %1139 = vrot.lane.b32.xlu0 %v615, 90
  %v1140 = vpop.permute.xlu0 %1139
  %1141 = vrot.lane.b32.xlu0 %v616, 90
  %v1142 = vpop.permute.xlu0 %1141
  %1143 = vrot.lane.b32.xlu0 %v617, 90
  %v1144 = vpop.permute.xlu0 %1143
  %1145 = vrot.lane.b32.xlu0 %v618, 90
  %v1146 = vpop.permute.xlu0 %1145
  %1147 = vrot.lane.b32.xlu0 %v619, 90
  %v1148 = vpop.permute.xlu0 %1147
  %1149 = vrot.lane.b32.xlu0 %v620, 90
  %v1150 = vpop.permute.xlu0 %1149
  %1151 = vrot.lane.b32.xlu0 %v621, 90
  %v1152 = vpop.permute.xlu0 %1151
  %1153 = vrot.lane.b32.xlu0 %v622, 90
  %v1154 = vpop.permute.xlu0 %1153
  %1155 = vrot.lane.b32.xlu0 %v623, 90
  %v1156 = vpop.permute.xlu0 %1155
  %1157 = vrot.lane.b32.xlu0 %v624, 90
  %v1158 = vpop.permute.xlu0 %1157
  %1159 = vrot.lane.b32.xlu0 %v625, 90
  %v1160 = vpop.permute.xlu0 %1159
  %1161 = vrot.lane.b32.xlu0 %v626, 90
  %v1162 = vpop.permute.xlu0 %1161
  %v1163 = vsel %vm573, %v1132, %v1134
  %v1164 = vsel %vm573, %v1134, %v1136
  %v1165 = vsel %vm573, %v1136, %v1138
  %v1166 = vsel %vm573, %v1140, %v1142
  %v1167 = vsel %vm573, %v1142, %v1144
  %v1168 = vsel %vm573, %v1144, %v1146
  %v1169 = vsel %vm573, %v1148, %v1150
  %v1170 = vsel %vm573, %v1150, %v1152
  %v1171 = vsel %vm573, %v1152, %v1154
  %v1172 = vsel %vm573, %v1156, %v1158
  %v1173 = vsel %vm573, %v1158, %v1160
  %v1174 = vsel %vm573, %v1160, %v1162
  %1187 = vst [vmem:[#allocation2 + $0x618] sm:$0xff] %v1163
  %1188 = vst [vmem:[#allocation2 + $0x620] sm:$0xff] %v1164
  %1189 = vst [vmem:[#allocation2 + $0x628] sm:$0xff] %v1165
  %1190 = vst [vmem:[#allocation2 + $0x648] sm:$0xff] %v1166
  %1191 = vst [vmem:[#allocation2 + $0x650] sm:$0xff] %v1167
  %1192 = vst [vmem:[#allocation2 + $0x658] sm:$0xff] %v1168
  %1193 = vst [vmem:[#allocation2 + $0x678] sm:$0xff] %v1169
  %1194 = vst [vmem:[#allocation2 + $0x680] sm:$0xff] %v1170
  %1195 = vst [vmem:[#allocation2 + $0x688] sm:$0xff] %v1171
  %1196 = vst [vmem:[#allocation2 + $0x6a8] sm:$0xff] %v1172
  %1197 = vst [vmem:[#allocation2 + $0x6b0] sm:$0xff] %v1173
  %1198 = vst [vmem:[#allocation2 + $0x6b8] sm:$0xff] %v1174
  %v1199 = vld [vmem:[%s1] sm:$0xff]
  %v1200 = vld [vmem:[%s1 + $0x8] sm:$0xff]
  %v1201 = vld [vmem:[%s1 + $0x10] sm:$0xff]
  %v1202 = vld [vmem:[%s1 + $0x18] sm:$0xff]
  %v1203 = vld [vmem:[%s1 + $0x20] sm:$0xff]
  %v1204 = vld [vmem:[%s1 + $0x28] sm:$0xff]
  %v1205 = vld [vmem:[%s1 + $0x30] sm:$0xff]
  %v1206 = vld [vmem:[%s1 + $0x38] sm:$0xff]
  %v1207 = vld [vmem:[%s1 + $0x40] sm:$0xff]
  %v1208 = vld [vmem:[%s1 + $0x48] sm:$0xff]
  %v1209 = vld [vmem:[%s1 + $0x50] sm:$0xff]
  %v1210 = vld [vmem:[%s1 + $0x58] sm:$0xff]
  %v1211 = vld [vmem:[#allocation2] sm:$0xff]
  %v1212 = vld [vmem:[#allocation2 + $0x8] sm:$0xff]
  %v1213 = vld [vmem:[#allocation2 + $0x10] sm:$0xff]
  %v1214 = vld [vmem:[#allocation2 + $0x18] sm:$0xff]
  %v1215 = vld [vmem:[#allocation2 + $0x20] sm:$0xff]
  %v1216 = vld [vmem:[#allocation2 + $0x28] sm:$0xff]
  %v1217 = vld [vmem:[#allocation2 + $0x30] sm:$0xff]
  %v1218 = vld [vmem:[#allocation2 + $0x38] sm:$0xff]
  %v1219 = vld [vmem:[#allocation2 + $0x40] sm:$0xff]
  %v1220 = vld [vmem:[#allocation2 + $0x48] sm:$0xff]
  %v1221 = vld [vmem:[#allocation2 + $0x50] sm:$0xff]
  %v1222 = vld [vmem:[#allocation2 + $0x58] sm:$0xff]
  %v1223 = vld [vmem:[#allocation2 + $0x60] sm:$0xff]
  %v1224 = vld [vmem:[#allocation2 + $0x68] sm:$0xff]
  %v1225 = vld [vmem:[#allocation2 + $0x70] sm:$0xff]
  %v1226 = vld [vmem:[#allocation2 + $0x78] sm:$0xff]
  %v1227 = vld [vmem:[#allocation2 + $0x80] sm:$0xff]
  %v1228 = vld [vmem:[#allocation2 + $0x88] sm:$0xff]
  %v1229 = vld [vmem:[#allocation2 + $0x90] sm:$0xff]
  %v1230 = vld [vmem:[#allocation2 + $0x98] sm:$0xff]
  %v1231 = vld [vmem:[#allocation2 + $0xa0] sm:$0xff]
  %v1232 = vld [vmem:[#allocation2 + $0xa8] sm:$0xff]
  %v1233 = vld [vmem:[#allocation2 + $0xb0] sm:$0xff]
  %v1234 = vld [vmem:[#allocation2 + $0xb8] sm:$0xff]
  %v1235 = vld [vmem:[#allocation2 + $0xc0] sm:$0xff]
  %v1236 = vld [vmem:[#allocation2 + $0xc8] sm:$0xff]
  %v1237 = vld [vmem:[#allocation2 + $0xd0] sm:$0xff]
  %v1238 = vld [vmem:[#allocation2 + $0xd8] sm:$0xff]
  %v1239 = vld [vmem:[#allocation2 + $0xe0] sm:$0xff]
  %v1240 = vld [vmem:[#allocation2 + $0xe8] sm:$0xff]
  %v1241 = vld [vmem:[#allocation2 + $0xf0] sm:$0xff]
  %v1242 = vld [vmem:[#allocation2 + $0xf8] sm:$0xff]
  %v1243 = vld [vmem:[#allocation2 + $0x100] sm:$0xff]
  %v1244 = vld [vmem:[#allocation2 + $0x108] sm:$0xff]
  %v1245 = vld [vmem:[#allocation2 + $0x110] sm:$0xff]
  %v1246 = vld [vmem:[#allocation2 + $0x118] sm:$0xff]
  %v1247 = vld [vmem:[#allocation2 + $0x120] sm:$0xff]
  %v1248 = vld [vmem:[#allocation2 + $0x128] sm:$0xff]
  %v1249 = vld [vmem:[#allocation2 + $0x130] sm:$0xff]
  %v1250 = vld [vmem:[#allocation2 + $0x138] sm:$0xff]
  %v1251 = vld [vmem:[#allocation2 + $0x140] sm:$0xff]
  %v1252 = vld [vmem:[#allocation2 + $0x148] sm:$0xff]
  %v1253 = vld [vmem:[#allocation2 + $0x150] sm:$0xff]
  %v1254 = vld [vmem:[#allocation2 + $0x158] sm:$0xff]
  %v1255 = vld [vmem:[#allocation2 + $0x160] sm:$0xff]
  %v1256 = vld [vmem:[#allocation2 + $0x168] sm:$0xff]
  %v1257 = vld [vmem:[#allocation2 + $0x170] sm:$0xff]
  %v1258 = vld [vmem:[#allocation2 + $0x178] sm:$0xff]
  %v1259 = vld [vmem:[#allocation2 + $0x180] sm:$0xff]
  %v1260 = vld [vmem:[#allocation2 + $0x188] sm:$0xff]
  %v1261 = vld [vmem:[#allocation2 + $0x190] sm:$0xff]
  %v1262 = vld [vmem:[#allocation2 + $0x198] sm:$0xff]
  %v1263 = vld [vmem:[#allocation2 + $0x1a0] sm:$0xff]
  %v1264 = vld [vmem:[#allocation2 + $0x1a8] sm:$0xff]
  %v1265 = vld [vmem:[#allocation2 + $0x1b0] sm:$0xff]
  %v1266 = vld [vmem:[#allocation2 + $0x1b8] sm:$0xff]
  %v1267 = vld [vmem:[#allocation2 + $0x1c0] sm:$0xff]
  %v1268 = vld [vmem:[#allocation2 + $0x1c8] sm:$0xff]
  %v1269 = vld [vmem:[#allocation2 + $0x1d0] sm:$0xff]
  %v1270 = vld [vmem:[#allocation2 + $0x1d8] sm:$0xff]
  %v1271 = vld [vmem:[#allocation2 + $0x1e0] sm:$0xff]
  %v1272 = vld [vmem:[#allocation2 + $0x1e8] sm:$0xff]
  %v1273 = vld [vmem:[#allocation2 + $0x1f0] sm:$0xff]
  %v1274 = vld [vmem:[#allocation2 + $0x1f8] sm:$0xff]
  %v1275 = vld [vmem:[#allocation2 + $0x200] sm:$0xff]
  %v1276 = vld [vmem:[#allocation2 + $0x208] sm:$0xff]
  %v1277 = vld [vmem:[#allocation2 + $0x210] sm:$0xff]
  %v1278 = vld [vmem:[#allocation2 + $0x218] sm:$0xff]
  %v1279 = vld [vmem:[#allocation2 + $0x220] sm:$0xff]
  %v1280 = vld [vmem:[#allocation2 + $0x228] sm:$0xff]
  %v1281 = vld [vmem:[#allocation2 + $0x230] sm:$0xff]
  %v1282 = vld [vmem:[#allocation2 + $0x238] sm:$0xff]
  %v1283 = vld [vmem:[#allocation2 + $0x240] sm:$0xff]
  %v1284 = vld [vmem:[#allocation2 + $0x248] sm:$0xff]
  %v1285 = vld [vmem:[#allocation2 + $0x250] sm:$0xff]
  %v1286 = vld [vmem:[#allocation2 + $0x258] sm:$0xff]
  %v1287 = vld [vmem:[#allocation2 + $0x260] sm:$0xff]
  %v1288 = vld [vmem:[#allocation2 + $0x268] sm:$0xff]
  %v1289 = vld [vmem:[#allocation2 + $0x270] sm:$0xff]
  %v1290 = vld [vmem:[#allocation2 + $0x278] sm:$0xff]
  %v1291 = vld [vmem:[#allocation2 + $0x280] sm:$0xff]
  %v1292 = vld [vmem:[#allocation2 + $0x288] sm:$0xff]
  %v1293 = vld [vmem:[#allocation2 + $0x290] sm:$0xff]
  %v1294 = vld [vmem:[#allocation2 + $0x298] sm:$0xff]
  %v1295 = vld [vmem:[#allocation2 + $0x2a0] sm:$0xff]
  %v1296 = vld [vmem:[#allocation2 + $0x2a8] sm:$0xff]
  %v1297 = vld [vmem:[#allocation2 + $0x2b0] sm:$0xff]
  %v1298 = vld [vmem:[#allocation2 + $0x2b8] sm:$0xff]
  %v1299 = vld [vmem:[#allocation2 + $0x2c0] sm:$0xff]
  %v1300 = vld [vmem:[#allocation2 + $0x2c8] sm:$0xff]
  %v1301 = vld [vmem:[#allocation2 + $0x2d0] sm:$0xff]
  %v1302 = vld [vmem:[#allocation2 + $0x2d8] sm:$0xff]
  %v1303 = vld [vmem:[#allocation2 + $0x2e0] sm:$0xff]
  %v1304 = vld [vmem:[#allocation2 + $0x2e8] sm:$0xff]
  %v1305 = vld [vmem:[#allocation2 + $0x2f0] sm:$0xff]
  %v1306 = vld [vmem:[#allocation2 + $0x2f8] sm:$0xff]
  %v1307 = vld [vmem:[#allocation2 + $0x300] sm:$0xff]
  %v1308 = vld [vmem:[#allocation2 + $0x308] sm:$0xff]
  %v1309 = vld [vmem:[#allocation2 + $0x310] sm:$0xff]
  %v1310 = vld [vmem:[#allocation2 + $0x318] sm:$0xff]
  %v1311 = vld [vmem:[#allocation2 + $0x320] sm:$0xff]
  %v1312 = vld [vmem:[#allocation2 + $0x328] sm:$0xff]
  %v1313 = vld [vmem:[#allocation2 + $0x330] sm:$0xff]
  %v1314 = vld [vmem:[#allocation2 + $0x338] sm:$0xff]
  %v1315 = vld [vmem:[#allocation2 + $0x340] sm:$0xff]
  %v1316 = vld [vmem:[#allocation2 + $0x348] sm:$0xff]
  %v1317 = vld [vmem:[#allocation2 + $0x350] sm:$0xff]
  %v1318 = vld [vmem:[#allocation2 + $0x358] sm:$0xff]
  %v1319 = vld [vmem:[#allocation2 + $0x360] sm:$0xff]
  %v1320 = vld [vmem:[#allocation2 + $0x368] sm:$0xff]
  %v1321 = vld [vmem:[#allocation2 + $0x370] sm:$0xff]
  %v1322 = vld [vmem:[#allocation2 + $0x378] sm:$0xff]
  %v1323 = vld [vmem:[#allocation2 + $0x380] sm:$0xff]
  %v1324 = vld [vmem:[#allocation2 + $0x388] sm:$0xff]
  %v1325 = vld [vmem:[#allocation2 + $0x390] sm:$0xff]
  %v1326 = vld [vmem:[#allocation2 + $0x398] sm:$0xff]
  %v1327 = vld [vmem:[#allocation2 + $0x3a0] sm:$0xff]
  %v1328 = vld [vmem:[#allocation2 + $0x3a8] sm:$0xff]
  %v1329 = vld [vmem:[#allocation2 + $0x3b0] sm:$0xff]
  %v1330 = vld [vmem:[#allocation2 + $0x3b8] sm:$0xff]
  %v1331 = vld [vmem:[#allocation2 + $0x3c0] sm:$0xff]
  %v1332 = vld [vmem:[#allocation2 + $0x3c8] sm:$0xff]
  %v1333 = vld [vmem:[#allocation2 + $0x3d0] sm:$0xff]
  %v1334 = vld [vmem:[#allocation2 + $0x3d8] sm:$0xff]
  %v1335 = vld [vmem:[#allocation2 + $0x3e0] sm:$0xff]
  %v1336 = vld [vmem:[#allocation2 + $0x3e8] sm:$0xff]
  %v1337 = vld [vmem:[#allocation2 + $0x3f0] sm:$0xff]
  %v1338 = vld [vmem:[#allocation2 + $0x3f8] sm:$0xff]
  %v1339 = vld [vmem:[#allocation2 + $0x400] sm:$0xff]
  %v1340 = vld [vmem:[#allocation2 + $0x408] sm:$0xff]
  %v1341 = vld [vmem:[#allocation2 + $0x410] sm:$0xff]
  %v1342 = vld [vmem:[#allocation2 + $0x418] sm:$0xff]
  %v1343 = vld [vmem:[#allocation2 + $0x420] sm:$0xff]
  %v1344 = vld [vmem:[#allocation2 + $0x428] sm:$0xff]
  %v1345 = vld [vmem:[#allocation2 + $0x430] sm:$0xff]
  %v1346 = vld [vmem:[#allocation2 + $0x438] sm:$0xff]
  %v1347 = vld [vmem:[#allocation2 + $0x440] sm:$0xff]
  %v1348 = vld [vmem:[#allocation2 + $0x448] sm:$0xff]
  %v1349 = vld [vmem:[#allocation2 + $0x450] sm:$0xff]
  %v1350 = vld [vmem:[#allocation2 + $0x458] sm:$0xff]
  %v1351 = vld [vmem:[#allocation2 + $0x460] sm:$0xff]
  %v1352 = vld [vmem:[#allocation2 + $0x468] sm:$0xff]
  %v1353 = vld [vmem:[#allocation2 + $0x470] sm:$0xff]
  %v1354 = vld [vmem:[#allocation2 + $0x478] sm:$0xff]
  %v1355 = vld [vmem:[#allocation2 + $0x480] sm:$0xff]
  %v1356 = vld [vmem:[#allocation2 + $0x488] sm:$0xff]
  %v1357 = vld [vmem:[#allocation2 + $0x490] sm:$0xff]
  %v1358 = vld [vmem:[#allocation2 + $0x498] sm:$0xff]
  %v1359 = vld [vmem:[#allocation2 + $0x4a0] sm:$0xff]
  %v1360 = vld [vmem:[#allocation2 + $0x4a8] sm:$0xff]
  %v1361 = vld [vmem:[#allocation2 + $0x4b0] sm:$0xff]
  %v1362 = vld [vmem:[#allocation2 + $0x4b8] sm:$0xff]
  %v1363 = vld [vmem:[#allocation2 + $0x4c0] sm:$0xff]
  %v1364 = vld [vmem:[#allocation2 + $0x4c8] sm:$0xff]
  %v1365 = vld [vmem:[#allocation2 + $0x4d0] sm:$0xff]
  %v1366 = vld [vmem:[#allocation2 + $0x4d8] sm:$0xff]
  %v1367 = vld [vmem:[#allocation2 + $0x4e0] sm:$0xff]
  %v1368 = vld [vmem:[#allocation2 + $0x4e8] sm:$0xff]
  %v1369 = vld [vmem:[#allocation2 + $0x4f0] sm:$0xff]
  %v1370 = vld [vmem:[#allocation2 + $0x4f8] sm:$0xff]
  %v1371 = vld [vmem:[#allocation2 + $0x500] sm:$0xff]
  %v1372 = vld [vmem:[#allocation2 + $0x508] sm:$0xff]
  %v1373 = vld [vmem:[#allocation2 + $0x510] sm:$0xff]
  %v1374 = vld [vmem:[#allocation2 + $0x518] sm:$0xff]
  %v1375 = vld [vmem:[#allocation2 + $0x520] sm:$0xff]
  %v1376 = vld [vmem:[#allocation2 + $0x528] sm:$0xff]
  %v1377 = vld [vmem:[#allocation2 + $0x530] sm:$0xff]
  %v1378 = vld [vmem:[#allocation2 + $0x538] sm:$0xff]
  %v1379 = vld [vmem:[#allocation2 + $0x540] sm:$0xff]
  %v1380 = vld [vmem:[#allocation2 + $0x548] sm:$0xff]
  %v1381 = vld [vmem:[#allocation2 + $0x550] sm:$0xff]
  %v1382 = vld [vmem:[#allocation2 + $0x558] sm:$0xff]
  %v1383 = vld [vmem:[#allocation2 + $0x560] sm:$0xff]
  %v1384 = vld [vmem:[#allocation2 + $0x568] sm:$0xff]
  %v1385 = vld [vmem:[#allocation2 + $0x570] sm:$0xff]
  %v1386 = vld [vmem:[#allocation2 + $0x578] sm:$0xff]
  %v1387 = vld [vmem:[#allocation2 + $0x580] sm:$0xff]
  %v1388 = vld [vmem:[#allocation2 + $0x588] sm:$0xff]
  %v1389 = vld [vmem:[#allocation2 + $0x590] sm:$0xff]
  %v1390 = vld [vmem:[#allocation2 + $0x598] sm:$0xff]
  %v1391 = vld [vmem:[#allocation2 + $0x5a0] sm:$0xff]
  %v1392 = vld [vmem:[#allocation2 + $0x5a8] sm:$0xff]
  %v1393 = vld [vmem:[#allocation2 + $0x5b0] sm:$0xff]
  %v1394 = vld [vmem:[#allocation2 + $0x5b8] sm:$0xff]
  %v1395 = vld [vmem:[#allocation2 + $0x5c0] sm:$0xff]
  %v1396 = vld [vmem:[#allocation2 + $0x5c8] sm:$0xff]
  %v1397 = vld [vmem:[#allocation2 + $0x5d0] sm:$0xff]
  %v1398 = vld [vmem:[#allocation2 + $0x5d8] sm:$0xff]
  %v1399 = vld [vmem:[#allocation2 + $0x5e0] sm:$0xff]
  %v1400 = vld [vmem:[#allocation2 + $0x5e8] sm:$0xff]
  %v1401 = vld [vmem:[#allocation2 + $0x5f0] sm:$0xff]
  %v1402 = vld [vmem:[#allocation2 + $0x5f8] sm:$0xff]
  %v1403 = vld [vmem:[#allocation2 + $0x600] sm:$0xff]
  %v1404 = vld [vmem:[#allocation2 + $0x608] sm:$0xff]
  %v1405 = vld [vmem:[#allocation2 + $0x610] sm:$0xff]
  %v1406 = vld [vmem:[#allocation2 + $0x618] sm:$0xff]
  %v1407 = vld [vmem:[#allocation2 + $0x620] sm:$0xff]
  %v1408 = vld [vmem:[#allocation2 + $0x628] sm:$0xff]
  %v1409 = vld [vmem:[#allocation2 + $0x630] sm:$0xff]
  %v1410 = vld [vmem:[#allocation2 + $0x638] sm:$0xff]
  %v1411 = vld [vmem:[#allocation2 + $0x640] sm:$0xff]
  %v1412 = vld [vmem:[#allocation2 + $0x648] sm:$0xff]
  %v1413 = vld [vmem:[#allocation2 + $0x650] sm:$0xff]
  %v1414 = vld [vmem:[#allocation2 + $0x658] sm:$0xff]
  %v1415 = vld [vmem:[#allocation2 + $0x660] sm:$0xff]
  %v1416 = vld [vmem:[#allocation2 + $0x668] sm:$0xff]
  %v1417 = vld [vmem:[#allocation2 + $0x670] sm:$0xff]
  %v1418 = vld [vmem:[#allocation2 + $0x678] sm:$0xff]
  %v1419 = vld [vmem:[#allocation2 + $0x680] sm:$0xff]
  %v1420 = vld [vmem:[#allocation2 + $0x688] sm:$0xff]
  %v1421 = vld [vmem:[#allocation2 + $0x690] sm:$0xff]
  %v1422 = vld [vmem:[#allocation2 + $0x698] sm:$0xff]
  %v1423 = vld [vmem:[#allocation2 + $0x6a0] sm:$0xff]
  %v1424 = vld [vmem:[#allocation2 + $0x6a8] sm:$0xff]
  %v1425 = vld [vmem:[#allocation2 + $0x6b0] sm:$0xff]
  %v1426 = vld [vmem:[#allocation2 + $0x6b8] sm:$0xff]
  %v1427 = vld [vmem:[%s2] sm:$0xff]
  %v1428 = vld [vmem:[%s2 + $0x8] sm:$0xff]
  %v1429 = vld [vmem:[%s2 + $0x10] sm:$0xff]
  %v1430 = vld [vmem:[%s2 + $0x18] sm:$0xff]
  %1432 = vset.pattern.permute.xlu0 0
  %1433 = vperm.xlu0 %1432, %v1427
  %v1434 = vpop.permute.xlu0 %1433
  %1437 = vset.pattern.permute.xlu0 0
  %1438 = vperm.xlu0 %1437, %v1428
  %v1439 = vpop.permute.xlu0 %1438
  %1442 = vset.pattern.permute.xlu0 0
  %1443 = vperm.xlu0 %1442, %v1429
  %v1444 = vpop.permute.xlu0 %1443
  %1447 = vset.pattern.permute.xlu0 0
  %1448 = vperm.xlu0 %1447, %v1430
  %v1449 = vpop.permute.xlu0 %1448
  %vm1451 = vcmask 261120
  %v1453 = vsel %vm1451, %v1201, 0
  %v1456 = vsel %vm1451, %v1204, 0
  %v1459 = vsel %vm1451, %v1207, 0
  %v1462 = vsel %vm1451, %v1210, 0
  %1464 = vmatprep.subr.mxu0 %v1212
  %1465 = vmatpush1.msra.mxu0 %v1211
  %1466 = vmatprep.subr.mxu0 %v1218
  %1467 = vmatpush1.msra.mxu0 %v1217
  %1468 = vmatprep.subr.mxu0 %v1224
  %1469 = vmatpush1.msra.mxu0 %v1223
  %1470 = vmatprep.subr.mxu0 %v1230
  %1471 = vmatpush1.msra.mxu0 %v1229
  %1472 = vmatprep.subr.mxu0 %v1236
  %1473 = vmatpush1.msra.mxu0 %v1235
  %1474 = vmatprep.subr.mxu0 %v1242
  %1475 = vmatpush1.msra.mxu0 %v1241
  %1476 = vmatprep.subr.mxu0 %v1248
  %1477 = vmatpush1.msra.mxu0 %v1247
  %1478 = vmatprep.subr.mxu0 %v1254
  %1479 = vmatpush1.msra.mxu0 %v1253
  %1480 = vmatprep.subr.mxu0 %v1260
  %1481 = vmatpush1.msra.mxu0 %v1259
  %1482 = vmatprep.subr.mxu0 %v1266
  %1483 = vmatpush1.msra.mxu0 %v1265
  %1484 = vmatprep.subr.mxu0 %v1272
  %1485 = vmatpush1.msra.mxu0 %v1271
  %1486 = vmatprep.subr.mxu0 %v1278
  %1487 = vmatpush1.msra.mxu0 %v1277
  %1488 = vmatprep.subr.mxu0 %v1284
  %1489 = vmatpush1.msra.mxu0 %v1283
  %1490 = vmatprep.subr.mxu0 %v1290
  %1491 = vmatpush1.msra.mxu0 %v1289
  %1492 = vmatprep.subr.mxu0 %v1296
  %1493 = vmatpush1.msra.mxu0 %v1295
  %1494 = vmatprep.subr.mxu0 %v1302
  %1495 = vmatpush1.msra.mxu0 %v1301
  %1496 = vmatprep.subr.mxu0 %v1308
  %1497 = vmatpush1.msra.mxu0 %v1307
  %1498 = vmatprep.subr.mxu0 %v1314
  %1499 = vmatpush1.msra.mxu0 %v1313
  %1500 = vmatprep.subr.mxu0 %v1320
  %1501 = vmatpush1.msra.mxu0 %v1319
  %1502 = vmatprep.subr.mxu0 %v1326
  %1503 = vmatpush1.msra.mxu0 %v1325
  %1504 = vmatprep.subr.mxu0 %v1332
  %1505 = vmatpush1.msra.mxu0 %v1331
  %1506 = vmatprep.subr.mxu0 %v1338
  %1507 = vmatpush1.msra.mxu0 %v1337
  %1508 = vmatprep.subr.mxu0 %v1344
  %1509 = vmatpush1.msra.mxu0 %v1343
  %1510 = vmatprep.subr.mxu0 %v1350
  %1511 = vmatpush1.msra.mxu0 %v1349
  %1512 = vmatprep.subr.mxu0 %v1356
  %1513 = vmatpush1.msra.mxu0 %v1355
  %1514 = vmatprep.subr.mxu0 %v1362
  %1515 = vmatpush1.msra.mxu0 %v1361
  %1516 = vmatprep.subr.mxu0 %v1368
  %1517 = vmatpush1.msra.mxu0 %v1367
  %1518 = vmatprep.subr.mxu0 %v1374
  %1519 = vmatpush1.msra.mxu0 %v1373
  %1520 = vmatprep.subr.mxu0 %v1380
  %1521 = vmatpush1.msra.mxu0 %v1379
  %1522 = vmatprep.subr.mxu0 %v1386
  %1523 = vmatpush1.msra.mxu0 %v1385
  %1524 = vmatprep.subr.mxu0 %v1392
  %1525 = vmatpush1.msra.mxu0 %v1391
  %1526 = vmatprep.subr.mxu0 %v1398
  %1527 = vmatpush1.msra.mxu0 %v1397
  %1528 = vmatprep.mubr.f32.mxu0 %v1200
  %1529 = vmatmul.mubr.f32.gmra.mrb[0].mxu0 %v1199
  %v1530 = vpop.f32.mrb[0].mxu0
  %v1531 = vadd.f32 %v1434, %v1530
  %v1532 = vpop.f32.mrb[0].mxu0
  %v1533 = vadd.f32 %v1434, %v1532
  %1534 = vmatprep.mubr.f32.mxu0 %v1203
  %1535 = vmatmul.mubr.f32.gmra.mrb[0].mxu0 %v1202
  %v1536 = vpop.f32.mrb[0].mxu0
  %v1537 = vadd.f32 %v1439, %v1536
  %v1538 = vpop.f32.mrb[0].mxu0
  %v1539 = vadd.f32 %v1439, %v1538
  %1540 = vmatprep.mubr.f32.mxu0 %v1206
  %1541 = vmatmul.mubr.f32.gmra.mrb[0].mxu0 %v1205
  %v1542 = vpop.f32.mrb[0].mxu0
  %v1543 = vadd.f32 %v1444, %v1542
  %v1544 = vpop.f32.mrb[0].mxu0
  %v1545 = vadd.f32 %v1444, %v1544
  %1546 = vmatprep.mubr.f32.mxu0 %v1209
  %1547 = vmatmul.mubr.f32.gmra.mrb[0].mxu0 %v1208
  %v1548 = vpop.f32.mrb[0].mxu0
  %v1549 = vadd.f32 %v1449, %v1548
  %v1550 = vpop.f32.mrb[0].mxu0
  %v1551 = vadd.f32 %v1449, %v1550
  %1552 = vdwg.mxu0
  %1553 = vmatprep.subr.mxu0 %v1404
  %1554 = vmatpush1.msra.mxu0 %v1403
  %1555 = vmatprep.subr.mxu0 %v1410
  %1556 = vmatpush1.msra.mxu0 %v1409
  %1557 = vmatprep.subr.mxu0 %v1416
  %1558 = vmatpush1.msra.mxu0 %v1415
  %1559 = vmatprep.subr.mxu0 %v1422
  %1560 = vmatpush1.msra.mxu0 %v1421
  %1561 = vmatprep.subr.mxu0 0.0
  %1562 = vmatpush1.msra.mxu0 0.0
  %1563 = vmatprep.subr.mxu0 0.0
  %1564 = vmatpush1.msra.mxu0 0.0
  %1565 = vmatprep.subr.mxu0 0.0
  %1566 = vmatpush1.msra.mxu0 0.0
  %1567 = vmatprep.subr.mxu0 0.0
  %1568 = vmatpush1.msra.mxu0 0.0
  %1569 = vmatprep.subr.mxu0 0.0
  %1570 = vmatpush1.msra.mxu0 0.0
  %1571 = vmatprep.subr.mxu0 0.0
  %1572 = vmatpush1.msra.mxu0 0.0
  %1573 = vmatprep.subr.mxu0 0.0
  %1574 = vmatpush1.msra.mxu0 0.0
  %1575 = vmatprep.subr.mxu0 0.0
  %1576 = vmatpush1.msra.mxu0 0.0
  %1577 = vmatprep.subr.mxu0 0.0
  %1578 = vmatpush1.msra.mxu0 0.0
  %1579 = vmatprep.subr.mxu0 0.0
  %1580 = vmatpush1.msra.mxu0 0.0
  %1581 = vmatprep.subr.mxu0 0.0
  %1582 = vmatpush1.msra.mxu0 0.0
  %1583 = vmatprep.subr.mxu0 0.0
  %1584 = vmatpush1.msra.mxu0 0.0
  %1585 = vmatprep.subr.mxu0 0.0
  %1586 = vmatpush1.msra.mxu0 0.0
  %1587 = vmatprep.subr.mxu0 0.0
  %1588 = vmatpush1.msra.mxu0 0.0
  %1589 = vmatprep.subr.mxu0 0.0
  %1590 = vmatpush1.msra.mxu0 0.0
  %1591 = vmatprep.subr.mxu0 0.0
  %1592 = vmatpush1.msra.mxu0 0.0
  %1593 = vmatprep.subr.mxu0 0.0
  %1594 = vmatpush1.msra.mxu0 0.0
  %1595 = vmatprep.subr.mxu0 0.0
  %1596 = vmatpush1.msra.mxu0 0.0
  %1597 = vmatprep.subr.mxu0 0.0
  %1598 = vmatpush1.msra.mxu0 0.0
  %1599 = vmatprep.subr.mxu0 0.0
  %1600 = vmatpush1.msra.mxu0 0.0
  %1601 = vmatprep.subr.mxu0 0.0
  %1602 = vmatpush1.msra.mxu0 0.0
  %1603 = vmatprep.subr.mxu0 0.0
  %1604 = vmatpush1.msra.mxu0 0.0
  %1605 = vmatprep.subr.mxu0 0.0
  %1606 = vmatpush1.msra.mxu0 0.0
  %1607 = vmatprep.subr.mxu0 0.0
  %1608 = vmatpush1.msra.mxu0 0.0
  %1609 = vmatprep.subr.mxu0 0.0
  %1610 = vmatpush1.msra.mxu0 0.0
  %1611 = vmatprep.subr.mxu0 0.0
  %1612 = vmatpush1.msra.mxu0 0.0
  %1613 = vmatprep.subr.mxu0 0.0
  %1614 = vmatpush1.msra.mxu0 0.0
  %1615 = vmatprep.subr.mxu0 0.0
  %1616 = vmatpush1.msra.mxu0 0.0
  %1617 = vmatprep.mubr.f32.mxu0 0.0
  %1618 = vmatmul.mubr.f32.gmra.mrb[0].mxu0 %v1453
  %v1619 = vpop.f32.mrb[0].mxu0
  %v1620 = vadd.f32 %v1531, %v1619
  %v1621 = vpop.f32.mrb[0].mxu0
  %v1622 = vadd.f32 %v1533, %v1621
  %1623 = vmatprep.mubr.f32.mxu0 0.0
  %1624 = vmatmul.mubr.f32.gmra.mrb[0].mxu0 %v1456
  %v1625 = vpop.f32.mrb[0].mxu0
  %v1626 = vadd.f32 %v1537, %v1625
  %v1627 = vpop.f32.mrb[0].mxu0
  %v1628 = vadd.f32 %v1539, %v1627
  %1629 = vmatprep.mubr.f32.mxu0 0.0
  %1630 = vmatmul.mubr.f32.gmra.mrb[0].mxu0 %v1459
  %v1631 = vpop.f32.mrb[0].mxu0
  %v1632 = vadd.f32 %v1543, %v1631
  %v1633 = vpop.f32.mrb[0].mxu0
  %v1634 = vadd.f32 %v1545, %v1633
  %1635 = vmatprep.mubr.f32.mxu0 0.0
  %1636 = vmatmul.mubr.f32.gmra.mrb[0].mxu0 %v1462
  %v1637 = vpop.f32.mrb[0].mxu0
  %v1638 = vadd.f32 %v1549, %v1637
  %v1639 = vpop.f32.mrb[0].mxu0
  %v1640 = vadd.f32 %v1551, %v1639
  %1641 = vdwg.mxu0
  %1642 = vmatprep.subr.mxu0 %v1214
  %1643 = vmatpush1.msra.mxu0 %v1213
  %1644 = vmatprep.subr.mxu0 %v1220
  %1645 = vmatpush1.msra.mxu0 %v1219
  %1646 = vmatprep.subr.mxu0 %v1226
  %1647 = vmatpush1.msra.mxu0 %v1225
  %1648 = vmatprep.subr.mxu0 %v1232
  %1649 = vmatpush1.msra.mxu0 %v1231
  %1650 = vmatprep.subr.mxu0 %v1238
  %1651 = vmatpush1.msra.mxu0 %v1237
  %1652 = vmatprep.subr.mxu0 %v1244
  %1653 = vmatpush1.msra.mxu0 %v1243
  %1654 = vmatprep.subr.mxu0 %v1250
  %1655 = vmatpush1.msra.mxu0 %v1249
  %1656 = vmatprep.subr.mxu0 %v1256
  %1657 = vmatpush1.msra.mxu0 %v1255
  %1658 = vmatprep.subr.mxu0 %v1262
  %1659 = vmatpush1.msra.mxu0 %v1261
  %1660 = vmatprep.subr.mxu0 %v1268
  %1661 = vmatpush1.msra.mxu0 %v1267
  %1662 = vmatprep.subr.mxu0 %v1274
  %1663 = vmatpush1.msra.mxu0 %v1273
  %1664 = vmatprep.subr.mxu0 %v1280
  %1665 = vmatpush1.msra.mxu0 %v1279
  %1666 = vmatprep.subr.mxu0 %v1286
  %1667 = vmatpush1.msra.mxu0 %v1285
  %1668 = vmatprep.subr.mxu0 %v1292
  %1669 = vmatpush1.msra.mxu0 %v1291
  %1670 = vmatprep.subr.mxu0 %v1298
  %1671 = vmatpush1.msra.mxu0 %v1297
  %1672 = vmatprep.subr.mxu0 %v1304
  %1673 = vmatpush1.msra.mxu0 %v1303
  %1674 = vmatprep.subr.mxu0 %v1310
  %1675 = vmatpush1.msra.mxu0 %v1309
  %1676 = vmatprep.subr.mxu0 %v1316
  %1677 = vmatpush1.msra.mxu0 %v1315
  %1678 = vmatprep.subr.mxu0 %v1322
  %1679 = vmatpush1.msra.mxu0 %v1321
  %1680 = vmatprep.subr.mxu0 %v1328
  %1681 = vmatpush1.msra.mxu0 %v1327
  %1682 = vmatprep.subr.mxu0 %v1334
  %1683 = vmatpush1.msra.mxu0 %v1333
  %1684 = vmatprep.subr.mxu0 %v1340
  %1685 = vmatpush1.msra.mxu0 %v1339
  %1686 = vmatprep.subr.mxu0 %v1346
  %1687 = vmatpush1.msra.mxu0 %v1345
  %1688 = vmatprep.subr.mxu0 %v1352
  %1689 = vmatpush1.msra.mxu0 %v1351
  %1690 = vmatprep.subr.mxu0 %v1358
  %1691 = vmatpush1.msra.mxu0 %v1357
  %1692 = vmatprep.subr.mxu0 %v1364
  %1693 = vmatpush1.msra.mxu0 %v1363
  %1694 = vmatprep.subr.mxu0 %v1370
  %1695 = vmatpush1.msra.mxu0 %v1369
  %1696 = vmatprep.subr.mxu0 %v1376
  %1697 = vmatpush1.msra.mxu0 %v1375
  %1698 = vmatprep.subr.mxu0 %v1382
  %1699 = vmatpush1.msra.mxu0 %v1381
  %1700 = vmatprep.subr.mxu0 %v1388
  %1701 = vmatpush1.msra.mxu0 %v1387
  %1702 = vmatprep.subr.mxu0 %v1394
  %1703 = vmatpush1.msra.mxu0 %v1393
  %1704 = vmatprep.subr.mxu0 %v1400
  %1705 = vmatpush1.msra.mxu0 %v1399
  %1706 = vmatprep.mubr.f32.mxu0 %v1200
  %1707 = vmatmul.mubr.f32.gmra.mrb[0].mxu0 %v1199
  %v1708 = vpop.f32.mrb[0].mxu0
  %v1709 = vadd.f32 %v1434, %v1708
  %v1710 = vpop.f32.mrb[0].mxu0
  %v1711 = vadd.f32 %v1434, %v1710
  %1712 = vmatprep.mubr.f32.mxu0 %v1203
  %1713 = vmatmul.mubr.f32.gmra.mrb[0].mxu0 %v1202
  %v1714 = vpop.f32.mrb[0].mxu0
  %v1715 = vadd.f32 %v1439, %v1714
  %v1716 = vpop.f32.mrb[0].mxu0
  %v1717 = vadd.f32 %v1439, %v1716
  %1718 = vmatprep.mubr.f32.mxu0 %v1206
  %1719 = vmatmul.mubr.f32.gmra.mrb[0].mxu0 %v1205
  %v1720 = vpop.f32.mrb[0].mxu0
  %v1721 = vadd.f32 %v1444, %v1720
  %v1722 = vpop.f32.mrb[0].mxu0
  %v1723 = vadd.f32 %v1444, %v1722
  %1724 = vmatprep.mubr.f32.mxu0 %v1209
  %1725 = vmatmul.mubr.f32.gmra.mrb[0].mxu0 %v1208
  %v1726 = vpop.f32.mrb[0].mxu0
  %v1727 = vadd.f32 %v1449, %v1726
  %v1728 = vpop.f32.mrb[0].mxu0
  %v1729 = vadd.f32 %v1449, %v1728
  %1730 = vdwg.mxu0
  %1731 = vmatprep.subr.mxu0 %v1406
  %1732 = vmatpush1.msra.mxu0 %v1405
  %1733 = vmatprep.subr.mxu0 %v1412
  %1734 = vmatpush1.msra.mxu0 %v1411
  %1735 = vmatprep.subr.mxu0 %v1418
  %1736 = vmatpush1.msra.mxu0 %v1417
  %1737 = vmatprep.subr.mxu0 %v1424
  %1738 = vmatpush1.msra.mxu0 %v1423
  %1739 = vmatprep.subr.mxu0 0.0
  %1740 = vmatpush1.msra.mxu0 0.0
  %1741 = vmatprep.subr.mxu0 0.0
  %1742 = vmatpush1.msra.mxu0 0.0
  %1743 = vmatprep.subr.mxu0 0.0
  %1744 = vmatpush1.msra.mxu0 0.0
  %1745 = vmatprep.subr.mxu0 0.0
  %1746 = vmatpush1.msra.mxu0 0.0
  %1747 = vmatprep.subr.mxu0 0.0
  %1748 = vmatpush1.msra.mxu0 0.0
  %1749 = vmatprep.subr.mxu0 0.0
  %1750 = vmatpush1.msra.mxu0 0.0
  %1751 = vmatprep.subr.mxu0 0.0
  %1752 = vmatpush1.msra.mxu0 0.0
  %1753 = vmatprep.subr.mxu0 0.0
  %1754 = vmatpush1.msra.mxu0 0.0
  %1755 = vmatprep.subr.mxu0 0.0
  %1756 = vmatpush1.msra.mxu0 0.0
  %1757 = vmatprep.subr.mxu0 0.0
  %1758 = vmatpush1.msra.mxu0 0.0
  %1759 = vmatprep.subr.mxu0 0.0
  %1760 = vmatpush1.msra.mxu0 0.0
  %1761 = vmatprep.subr.mxu0 0.0
  %1762 = vmatpush1.msra.mxu0 0.0
  %1763 = vmatprep.subr.mxu0 0.0
  %1764 = vmatpush1.msra.mxu0 0.0
  %1765 = vmatprep.subr.mxu0 0.0
  %1766 = vmatpush1.msra.mxu0 0.0
  %1767 = vmatprep.subr.mxu0 0.0
  %1768 = vmatpush1.msra.mxu0 0.0
  %1769 = vmatprep.subr.mxu0 0.0
  %1770 = vmatpush1.msra.mxu0 0.0
  %1771 = vmatprep.subr.mxu0 0.0
  %1772 = vmatpush1.msra.mxu0 0.0
  %1773 = vmatprep.subr.mxu0 0.0
  %1774 = vmatpush1.msra.mxu0 0.0
  %1775 = vmatprep.subr.mxu0 0.0
  %1776 = vmatpush1.msra.mxu0 0.0
  %1777 = vmatprep.subr.mxu0 0.0
  %1778 = vmatpush1.msra.mxu0 0.0
  %1779 = vmatprep.subr.mxu0 0.0
  %1780 = vmatpush1.msra.mxu0 0.0
  %1781 = vmatprep.subr.mxu0 0.0
  %1782 = vmatpush1.msra.mxu0 0.0
  %1783 = vmatprep.subr.mxu0 0.0
  %1784 = vmatpush1.msra.mxu0 0.0
  %1785 = vmatprep.subr.mxu0 0.0
  %1786 = vmatpush1.msra.mxu0 0.0
  %1787 = vmatprep.subr.mxu0 0.0
  %1788 = vmatpush1.msra.mxu0 0.0
  %1789 = vmatprep.subr.mxu0 0.0
  %1790 = vmatpush1.msra.mxu0 0.0
  %1791 = vmatprep.subr.mxu0 0.0
  %1792 = vmatpush1.msra.mxu0 0.0
  %1793 = vmatprep.subr.mxu0 0.0
  %1794 = vmatpush1.msra.mxu0 0.0
  %1795 = vmatprep.mubr.f32.mxu0 0.0
  %1796 = vmatmul.mubr.f32.gmra.mrb[0].mxu0 %v1453
  %v1797 = vpop.f32.mrb[0].mxu0
  %v1798 = vadd.f32 %v1709, %v1797
  %v1799 = vpop.f32.mrb[0].mxu0
  %v1800 = vadd.f32 %v1711, %v1799
  %1801 = vmatprep.mubr.f32.mxu0 0.0
  %1802 = vmatmul.mubr.f32.gmra.mrb[0].mxu0 %v1456
  %v1803 = vpop.f32.mrb[0].mxu0
  %v1804 = vadd.f32 %v1715, %v1803
  %v1805 = vpop.f32.mrb[0].mxu0
  %v1806 = vadd.f32 %v1717, %v1805
  %1807 = vmatprep.mubr.f32.mxu0 0.0
  %1808 = vmatmul.mubr.f32.gmra.mrb[0].mxu0 %v1459
  %v1809 = vpop.f32.mrb[0].mxu0
  %v1810 = vadd.f32 %v1721, %v1809
  %v1811 = vpop.f32.mrb[0].mxu0
  %v1812 = vadd.f32 %v1723, %v1811
  %1813 = vmatprep.mubr.f32.mxu0 0.0
  %1814 = vmatmul.mubr.f32.gmra.mrb[0].mxu0 %v1462
  %v1815 = vpop.f32.mrb[0].mxu0
  %v1816 = vadd.f32 %v1727, %v1815
  %v1817 = vpop.f32.mrb[0].mxu0
  %v1818 = vadd.f32 %v1729, %v1817
  %1819 = vdwg.mxu0
  %1820 = vmatprep.subr.mxu0 %v1216
  %1821 = vmatpush1.msra.mxu0 %v1215
  %1822 = vmatprep.subr.mxu0 %v1222
  %1823 = vmatpush1.msra.mxu0 %v1221
  %1824 = vmatprep.subr.mxu0 %v1228
  %1825 = vmatpush1.msra.mxu0 %v1227
  %1826 = vmatprep.subr.mxu0 %v1234
  %1827 = vmatpush1.msra.mxu0 %v1233
  %1828 = vmatprep.subr.mxu0 %v1240
  %1829 = vmatpush1.msra.mxu0 %v1239
  %1830 = vmatprep.subr.mxu0 %v1246
  %1831 = vmatpush1.msra.mxu0 %v1245
  %1832 = vmatprep.subr.mxu0 %v1252
  %1833 = vmatpush1.msra.mxu0 %v1251
  %1834 = vmatprep.subr.mxu0 %v1258
  %1835 = vmatpush1.msra.mxu0 %v1257
  %1836 = vmatprep.subr.mxu0 %v1264
  %1837 = vmatpush1.msra.mxu0 %v1263
  %1838 = vmatprep.subr.mxu0 %v1270
  %1839 = vmatpush1.msra.mxu0 %v1269
  %1840 = vmatprep.subr.mxu0 %v1276
  %1841 = vmatpush1.msra.mxu0 %v1275
  %1842 = vmatprep.subr.mxu0 %v1282
  %1843 = vmatpush1.msra.mxu0 %v1281
  %1844 = vmatprep.subr.mxu0 %v1288
  %1845 = vmatpush1.msra.mxu0 %v1287
  %1846 = vmatprep.subr.mxu0 %v1294
  %1847 = vmatpush1.msra.mxu0 %v1293
  %1848 = vmatprep.subr.mxu0 %v1300
  %1849 = vmatpush1.msra.mxu0 %v1299
  %1850 = vmatprep.subr.mxu0 %v1306
  %1851 = vmatpush1.msra.mxu0 %v1305
  %1852 = vmatprep.subr.mxu0 %v1312
  %1853 = vmatpush1.msra.mxu0 %v1311
  %1854 = vmatprep.subr.mxu0 %v1318
  %1855 = vmatpush1.msra.mxu0 %v1317
  %1856 = vmatprep.subr.mxu0 %v1324
  %1857 = vmatpush1.msra.mxu0 %v1323
  %1858 = vmatprep.subr.mxu0 %v1330
  %1859 = vmatpush1.msra.mxu0 %v1329
  %1860 = vmatprep.subr.mxu0 %v1336
  %1861 = vmatpush1.msra.mxu0 %v1335
  %1862 = vmatprep.subr.mxu0 %v1342
  %1863 = vmatpush1.msra.mxu0 %v1341
  %1864 = vmatprep.subr.mxu0 %v1348
  %1865 = vmatpush1.msra.mxu0 %v1347
  %1866 = vmatprep.subr.mxu0 %v1354
  %1867 = vmatpush1.msra.mxu0 %v1353
  %1868 = vmatprep.subr.mxu0 %v1360
  %1869 = vmatpush1.msra.mxu0 %v1359
  %1870 = vmatprep.subr.mxu0 %v1366
  %1871 = vmatpush1.msra.mxu0 %v1365
  %1872 = vmatprep.subr.mxu0 %v1372
  %1873 = vmatpush1.msra.mxu0 %v1371
  %1874 = vmatprep.subr.mxu0 %v1378
  %1875 = vmatpush1.msra.mxu0 %v1377
  %1876 = vmatprep.subr.mxu0 %v1384
  %1877 = vmatpush1.msra.mxu0 %v1383
  %1878 = vmatprep.subr.mxu0 %v1390
  %1879 = vmatpush1.msra.mxu0 %v1389
  %1880 = vmatprep.subr.mxu0 %v1396
  %1881 = vmatpush1.msra.mxu0 %v1395
  %1882 = vmatprep.subr.mxu0 %v1402
  %1883 = vmatpush1.msra.mxu0 %v1401
  %1884 = vmatprep.mubr.f32.mxu0 %v1200
  %1885 = vmatmul.mubr.f32.gmra.mrb[0].mxu0 %v1199
  %v1886 = vpop.f32.mrb[0].mxu0
  %v1887 = vadd.f32 %v1434, %v1886
  %v1888 = vpop.f32.mrb[0].mxu0
  %v1889 = vadd.f32 %v1434, %v1888
  %1890 = vmatprep.mubr.f32.mxu0 %v1203
  %1891 = vmatmul.mubr.f32.gmra.mrb[0].mxu0 %v1202
  %v1892 = vpop.f32.mrb[0].mxu0
  %v1893 = vadd.f32 %v1439, %v1892
  %v1894 = vpop.f32.mrb[0].mxu0
  %v1895 = vadd.f32 %v1439, %v1894
  %1896 = vmatprep.mubr.f32.mxu0 %v1206
  %1897 = vmatmul.mubr.f32.gmra.mrb[0].mxu0 %v1205
  %v1898 = vpop.f32.mrb[0].mxu0
  %v1899 = vadd.f32 %v1444, %v1898
  %v1900 = vpop.f32.mrb[0].mxu0
  %v1901 = vadd.f32 %v1444, %v1900
  %1902 = vmatprep.mubr.f32.mxu0 %v1209
  %1903 = vmatmul.mubr.f32.gmra.mrb[0].mxu0 %v1208
  %v1904 = vpop.f32.mrb[0].mxu0
  %v1905 = vadd.f32 %v1449, %v1904
  %v1906 = vpop.f32.mrb[0].mxu0
  %v1907 = vadd.f32 %v1449, %v1906
  %1908 = vdwg.mxu0
  %1909 = vmatprep.subr.mxu0 %v1408
  %1910 = vmatpush1.msra.mxu0 %v1407
  %1911 = vmatprep.subr.mxu0 %v1414
  %1912 = vmatpush1.msra.mxu0 %v1413
  %1913 = vmatprep.subr.mxu0 %v1420
  %1914 = vmatpush1.msra.mxu0 %v1419
  %1915 = vmatprep.subr.mxu0 %v1426
  %1916 = vmatpush1.msra.mxu0 %v1425
  %1917 = vmatprep.subr.mxu0 0.0
  %1918 = vmatpush1.msra.mxu0 0.0
  %1919 = vmatprep.subr.mxu0 0.0
  %1920 = vmatpush1.msra.mxu0 0.0
  %1921 = vmatprep.subr.mxu0 0.0
  %1922 = vmatpush1.msra.mxu0 0.0
  %1923 = vmatprep.subr.mxu0 0.0
  %1924 = vmatpush1.msra.mxu0 0.0
  %1925 = vmatprep.subr.mxu0 0.0
  %1926 = vmatpush1.msra.mxu0 0.0
  %1927 = vmatprep.subr.mxu0 0.0
  %1928 = vmatpush1.msra.mxu0 0.0
  %1929 = vmatprep.subr.mxu0 0.0
  %1930 = vmatpush1.msra.mxu0 0.0
  %1931 = vmatprep.subr.mxu0 0.0
  %1932 = vmatpush1.msra.mxu0 0.0
  %1933 = vmatprep.subr.mxu0 0.0
  %1934 = vmatpush1.msra.mxu0 0.0
  %1935 = vmatprep.subr.mxu0 0.0
  %1936 = vmatpush1.msra.mxu0 0.0
  %1937 = vmatprep.subr.mxu0 0.0
  %1938 = vmatpush1.msra.mxu0 0.0
  %1939 = vmatprep.subr.mxu0 0.0
  %1940 = vmatpush1.msra.mxu0 0.0
  %1941 = vmatprep.subr.mxu0 0.0
  %1942 = vmatpush1.msra.mxu0 0.0
  %1943 = vmatprep.subr.mxu0 0.0
  %1944 = vmatpush1.msra.mxu0 0.0
  %1945 = vmatprep.subr.mxu0 0.0
  %1946 = vmatpush1.msra.mxu0 0.0
  %1947 = vmatprep.subr.mxu0 0.0
  %1948 = vmatpush1.msra.mxu0 0.0
  %1949 = vmatprep.subr.mxu0 0.0
  %1950 = vmatpush1.msra.mxu0 0.0
  %1951 = vmatprep.subr.mxu0 0.0
  %1952 = vmatpush1.msra.mxu0 0.0
  %1953 = vmatprep.subr.mxu0 0.0
  %1954 = vmatpush1.msra.mxu0 0.0
  %1955 = vmatprep.subr.mxu0 0.0
  %1956 = vmatpush1.msra.mxu0 0.0
  %1957 = vmatprep.subr.mxu0 0.0
  %1958 = vmatpush1.msra.mxu0 0.0
  %1959 = vmatprep.subr.mxu0 0.0
  %1960 = vmatpush1.msra.mxu0 0.0
  %1961 = vmatprep.subr.mxu0 0.0
  %1962 = vmatpush1.msra.mxu0 0.0
  %1963 = vmatprep.subr.mxu0 0.0
  %1964 = vmatpush1.msra.mxu0 0.0
  %1965 = vmatprep.subr.mxu0 0.0
  %1966 = vmatpush1.msra.mxu0 0.0
  %1967 = vmatprep.subr.mxu0 0.0
  %1968 = vmatpush1.msra.mxu0 0.0
  %1969 = vmatprep.subr.mxu0 0.0
  %1970 = vmatpush1.msra.mxu0 0.0
  %1971 = vmatprep.subr.mxu0 0.0
  %1972 = vmatpush1.msra.mxu0 0.0
  %1973 = vmatprep.mubr.f32.mxu0 0.0
  %1974 = vmatmul.mubr.f32.gmra.mrb[0].mxu0 %v1453
  %v1975 = vpop.f32.mrb[0].mxu0
  %v1976 = vadd.f32 %v1887, %v1975
  %v1977 = vpop.f32.mrb[0].mxu0
  %v1978 = vadd.f32 %v1889, %v1977
  %1979 = vmatprep.mubr.f32.mxu0 0.0
  %1980 = vmatmul.mubr.f32.gmra.mrb[0].mxu0 %v1456
  %v1981 = vpop.f32.mrb[0].mxu0
  %v1982 = vadd.f32 %v1893, %v1981
  %v1983 = vpop.f32.mrb[0].mxu0
  %v1984 = vadd.f32 %v1895, %v1983
  %1985 = vmatprep.mubr.f32.mxu0 0.0
  %1986 = vmatmul.mubr.f32.gmra.mrb[0].mxu0 %v1459
  %v1987 = vpop.f32.mrb[0].mxu0
  %v1988 = vadd.f32 %v1899, %v1987
  %v1989 = vpop.f32.mrb[0].mxu0
  %v1990 = vadd.f32 %v1901, %v1989
  %1991 = vmatprep.mubr.f32.mxu0 0.0
  %1992 = vmatmul.mubr.f32.gmra.mrb[0].mxu0 %v1462
  %v1993 = vpop.f32.mrb[0].mxu0
  %v1994 = vadd.f32 %v1905, %v1993
  %v1995 = vpop.f32.mrb[0].mxu0
  %v1996 = vadd.f32 %v1907, %v1995
  %1997 = vdwg.mxu0
  %v1998 = vmul.f32 %v1620, %v1620
  %v1999 = vmul.f32 %v1622, %v1622
  %v2000 = vmul.f32 %v1798, %v1798
  %v2001 = vmul.f32 %v1800, %v1800
  %v2002 = vmul.f32 %v1976, %v1976
  %v2003 = vmul.f32 %v1978, %v1978
  %v2004 = vmul.f32 %v1626, %v1626
  %v2005 = vmul.f32 %v1628, %v1628
  %v2006 = vmul.f32 %v1804, %v1804
  %v2007 = vmul.f32 %v1806, %v1806
  %v2008 = vmul.f32 %v1982, %v1982
  %v2009 = vmul.f32 %v1984, %v1984
  %v2010 = vmul.f32 %v1632, %v1632
  %v2011 = vmul.f32 %v1634, %v1634
  %v2012 = vmul.f32 %v1810, %v1810
  %v2013 = vmul.f32 %v1812, %v1812
  %v2014 = vmul.f32 %v1988, %v1988
  %v2015 = vmul.f32 %v1990, %v1990
  %v2016 = vmul.f32 %v1638, %v1638
  %v2017 = vmul.f32 %v1640, %v1640
  %v2018 = vmul.f32 %v1816, %v1816
  %v2019 = vmul.f32 %v1818, %v1818
  %v2020 = vmul.f32 %v1994, %v1994
  %v2021 = vmul.f32 %v1996, %v1996
  %v2022 = vrot.slane %v1998, 4
  %v2023 = vadd.f32 %v1998, %v2022
  %v2024 = vrot.slane %v2023, 2
  %v2025 = vadd.f32 %v2023, %v2024
  %v2026 = vrot.slane %v2025, 1
  %v2027 = vadd.f32 %v2025, %v2026
  %v2028 = vrot.slane %v1999, 4
  %v2029 = vadd.f32 %v1999, %v2028
  %v2030 = vrot.slane %v2029, 2
  %v2031 = vadd.f32 %v2029, %v2030
  %v2032 = vrot.slane %v2031, 1
  %v2033 = vadd.f32 %v2031, %v2032
  %v2034 = vrot.slane %v2000, 4
  %v2035 = vadd.f32 %v2000, %v2034
  %v2036 = vrot.slane %v2035, 2
  %v2037 = vadd.f32 %v2035, %v2036
  %v2038 = vrot.slane %v2037, 1
  %v2039 = vadd.f32 %v2037, %v2038
  %v2040 = vrot.slane %v2001, 4
  %v2041 = vadd.f32 %v2001, %v2040
  %v2042 = vrot.slane %v2041, 2
  %v2043 = vadd.f32 %v2041, %v2042
  %v2044 = vrot.slane %v2043, 1
  %v2045 = vadd.f32 %v2043, %v2044
  %v2046 = vrot.slane %v2002, 4
  %v2047 = vadd.f32 %v2002, %v2046
  %v2048 = vrot.slane %v2047, 2
  %v2049 = vadd.f32 %v2047, %v2048
  %v2050 = vrot.slane %v2049, 1
  %v2051 = vadd.f32 %v2049, %v2050
  %v2052 = vrot.slane %v2003, 4
  %v2053 = vadd.f32 %v2003, %v2052
  %v2054 = vrot.slane %v2053, 2
  %v2055 = vadd.f32 %v2053, %v2054
  %v2056 = vrot.slane %v2055, 1
  %v2057 = vadd.f32 %v2055, %v2056
  %v2058 = vrot.slane %v2004, 4
  %v2059 = vadd.f32 %v2004, %v2058
  %v2060 = vrot.slane %v2059, 2
  %v2061 = vadd.f32 %v2059, %v2060
  %v2062 = vrot.slane %v2061, 1
  %v2063 = vadd.f32 %v2061, %v2062
  %v2064 = vrot.slane %v2005, 4
  %v2065 = vadd.f32 %v2005, %v2064
  %v2066 = vrot.slane %v2065, 2
  %v2067 = vadd.f32 %v2065, %v2066
  %v2068 = vrot.slane %v2067, 1
  %v2069 = vadd.f32 %v2067, %v2068
  %v2070 = vrot.slane %v2006, 4
  %v2071 = vadd.f32 %v2006, %v2070
  %v2072 = vrot.slane %v2071, 2
  %v2073 = vadd.f32 %v2071, %v2072
  %v2074 = vrot.slane %v2073, 1
  %v2075 = vadd.f32 %v2073, %v2074
  %v2076 = vrot.slane %v2007, 4
  %v2077 = vadd.f32 %v2007, %v2076
  %v2078 = vrot.slane %v2077, 2
  %v2079 = vadd.f32 %v2077, %v2078
  %v2080 = vrot.slane %v2079, 1
  %v2081 = vadd.f32 %v2079, %v2080
  %v2082 = vrot.slane %v2008, 4
  %v2083 = vadd.f32 %v2008, %v2082
  %v2084 = vrot.slane %v2083, 2
  %v2085 = vadd.f32 %v2083, %v2084
  %v2086 = vrot.slane %v2085, 1
  %v2087 = vadd.f32 %v2085, %v2086
  %v2088 = vrot.slane %v2009, 4
  %v2089 = vadd.f32 %v2009, %v2088
  %v2090 = vrot.slane %v2089, 2
  %v2091 = vadd.f32 %v2089, %v2090
  %v2092 = vrot.slane %v2091, 1
  %v2093 = vadd.f32 %v2091, %v2092
  %v2094 = vrot.slane %v2010, 4
  %v2095 = vadd.f32 %v2010, %v2094
  %v2096 = vrot.slane %v2095, 2
  %v2097 = vadd.f32 %v2095, %v2096
  %v2098 = vrot.slane %v2097, 1
  %v2099 = vadd.f32 %v2097, %v2098
  %v2100 = vrot.slane %v2011, 4
  %v2101 = vadd.f32 %v2011, %v2100
  %v2102 = vrot.slane %v2101, 2
  %v2103 = vadd.f32 %v2101, %v2102
  %v2104 = vrot.slane %v2103, 1
  %v2105 = vadd.f32 %v2103, %v2104
  %v2106 = vrot.slane %v2012, 4
  %v2107 = vadd.f32 %v2012, %v2106
  %v2108 = vrot.slane %v2107, 2
  %v2109 = vadd.f32 %v2107, %v2108
  %v2110 = vrot.slane %v2109, 1
  %v2111 = vadd.f32 %v2109, %v2110
  %v2112 = vrot.slane %v2013, 4
  %v2113 = vadd.f32 %v2013, %v2112
  %v2114 = vrot.slane %v2113, 2
  %v2115 = vadd.f32 %v2113, %v2114
  %v2116 = vrot.slane %v2115, 1
  %v2117 = vadd.f32 %v2115, %v2116
  %v2118 = vrot.slane %v2014, 4
  %v2119 = vadd.f32 %v2014, %v2118
  %v2120 = vrot.slane %v2119, 2
  %v2121 = vadd.f32 %v2119, %v2120
  %v2122 = vrot.slane %v2121, 1
  %v2123 = vadd.f32 %v2121, %v2122
  %v2124 = vrot.slane %v2015, 4
  %v2125 = vadd.f32 %v2015, %v2124
  %v2126 = vrot.slane %v2125, 2
  %v2127 = vadd.f32 %v2125, %v2126
  %v2128 = vrot.slane %v2127, 1
  %v2129 = vadd.f32 %v2127, %v2128
  %v2130 = vrot.slane %v2016, 4
  %v2131 = vadd.f32 %v2016, %v2130
  %v2132 = vrot.slane %v2131, 2
  %v2133 = vadd.f32 %v2131, %v2132
  %v2134 = vrot.slane %v2133, 1
  %v2135 = vadd.f32 %v2133, %v2134
  %v2136 = vrot.slane %v2017, 4
  %v2137 = vadd.f32 %v2017, %v2136
  %v2138 = vrot.slane %v2137, 2
  %v2139 = vadd.f32 %v2137, %v2138
  %v2140 = vrot.slane %v2139, 1
  %v2141 = vadd.f32 %v2139, %v2140
  %v2142 = vrot.slane %v2018, 4
  %v2143 = vadd.f32 %v2018, %v2142
  %v2144 = vrot.slane %v2143, 2
  %v2145 = vadd.f32 %v2143, %v2144
  %v2146 = vrot.slane %v2145, 1
  %v2147 = vadd.f32 %v2145, %v2146
  %v2148 = vrot.slane %v2019, 4
  %v2149 = vadd.f32 %v2019, %v2148
  %v2150 = vrot.slane %v2149, 2
  %v2151 = vadd.f32 %v2149, %v2150
  %v2152 = vrot.slane %v2151, 1
  %v2153 = vadd.f32 %v2151, %v2152
  %v2154 = vrot.slane %v2020, 4
  %v2155 = vadd.f32 %v2020, %v2154
  %v2156 = vrot.slane %v2155, 2
  %v2157 = vadd.f32 %v2155, %v2156
  %v2158 = vrot.slane %v2157, 1
  %v2159 = vadd.f32 %v2157, %v2158
  %v2160 = vrot.slane %v2021, 4
  %v2161 = vadd.f32 %v2021, %v2160
  %v2162 = vrot.slane %v2161, 2
  %v2163 = vadd.f32 %v2161, %v2162
  %v2164 = vrot.slane %v2163, 1
  %v2165 = vadd.f32 %v2163, %v2164
  %v2166 = vrsqrt.pop %v2027
  %v2167 = vmul.f32 %v2027, %v2166
  %vm2168 = vcmp.eq.f32.partialorder %v2027, inf
  %v2169 = vsel %vm2168, %v2027, %v2167
  %vm2170 = vcmp.eq.f32.partialorder %v2027, 0.0
  %v2171 = vand.u32 %v2027, 2147483648
  %v2172 = vsel %vm2170, %v2171, %v2169
  %v2173 = vrsqrt.pop %v2033
  %v2174 = vmul.f32 %v2033, %v2173
  %vm2175 = vcmp.eq.f32.partialorder %v2033, inf
  %v2176 = vsel %vm2175, %v2033, %v2174
  %vm2177 = vcmp.eq.f32.partialorder %v2033, 0.0
  %v2178 = vand.u32 %v2033, 2147483648
  %v2179 = vsel %vm2177, %v2178, %v2176
  %v2180 = vrsqrt.pop %v2039
  %v2181 = vmul.f32 %v2039, %v2180
  %vm2182 = vcmp.eq.f32.partialorder %v2039, inf
  %v2183 = vsel %vm2182, %v2039, %v2181
  %vm2184 = vcmp.eq.f32.partialorder %v2039, 0.0
  %v2185 = vand.u32 %v2039, 2147483648
  %v2186 = vsel %vm2184, %v2185, %v2183
  %v2187 = vrsqrt.pop %v2045
  %v2188 = vmul.f32 %v2045, %v2187
  %vm2189 = vcmp.eq.f32.partialorder %v2045, inf
  %v2190 = vsel %vm2189, %v2045, %v2188
  %vm2191 = vcmp.eq.f32.partialorder %v2045, 0.0
  %v2192 = vand.u32 %v2045, 2147483648
  %v2193 = vsel %vm2191, %v2192, %v2190
  %v2194 = vrsqrt.pop %v2051
  %v2195 = vmul.f32 %v2051, %v2194
  %vm2196 = vcmp.eq.f32.partialorder %v2051, inf
  %v2197 = vsel %vm2196, %v2051, %v2195
  %vm2198 = vcmp.eq.f32.partialorder %v2051, 0.0
  %v2199 = vand.u32 %v2051, 2147483648
  %v2200 = vsel %vm2198, %v2199, %v2197
  %v2201 = vrsqrt.pop %v2057
  %v2202 = vmul.f32 %v2057, %v2201
  %vm2203 = vcmp.eq.f32.partialorder %v2057, inf
  %v2204 = vsel %vm2203, %v2057, %v2202
  %vm2205 = vcmp.eq.f32.partialorder %v2057, 0.0
  %v2206 = vand.u32 %v2057, 2147483648
  %v2207 = vsel %vm2205, %v2206, %v2204
  %v2208 = vrsqrt.pop %v2063
  %v2209 = vmul.f32 %v2063, %v2208
  %vm2210 = vcmp.eq.f32.partialorder %v2063, inf
  %v2211 = vsel %vm2210, %v2063, %v2209
  %vm2212 = vcmp.eq.f32.partialorder %v2063, 0.0
  %v2213 = vand.u32 %v2063, 2147483648
  %v2214 = vsel %vm2212, %v2213, %v2211
  %v2215 = vrsqrt.pop %v2069
  %v2216 = vmul.f32 %v2069, %v2215
  %vm2217 = vcmp.eq.f32.partialorder %v2069, inf
  %v2218 = vsel %vm2217, %v2069, %v2216
  %vm2219 = vcmp.eq.f32.partialorder %v2069, 0.0
  %v2220 = vand.u32 %v2069, 2147483648
  %v2221 = vsel %vm2219, %v2220, %v2218
  %v2222 = vrsqrt.pop %v2075
  %v2223 = vmul.f32 %v2075, %v2222
  %vm2224 = vcmp.eq.f32.partialorder %v2075, inf
  %v2225 = vsel %vm2224, %v2075, %v2223
  %vm2226 = vcmp.eq.f32.partialorder %v2075, 0.0
  %v2227 = vand.u32 %v2075, 2147483648
  %v2228 = vsel %vm2226, %v2227, %v2225
  %v2229 = vrsqrt.pop %v2081
  %v2230 = vmul.f32 %v2081, %v2229
  %vm2231 = vcmp.eq.f32.partialorder %v2081, inf
  %v2232 = vsel %vm2231, %v2081, %v2230
  %vm2233 = vcmp.eq.f32.partialorder %v2081, 0.0
  %v2234 = vand.u32 %v2081, 2147483648
  %v2235 = vsel %vm2233, %v2234, %v2232
  %v2236 = vrsqrt.pop %v2087
  %v2237 = vmul.f32 %v2087, %v2236
  %vm2238 = vcmp.eq.f32.partialorder %v2087, inf
  %v2239 = vsel %vm2238, %v2087, %v2237
  %vm2240 = vcmp.eq.f32.partialorder %v2087, 0.0
  %v2241 = vand.u32 %v2087, 2147483648
  %v2242 = vsel %vm2240, %v2241, %v2239
  %v2243 = vrsqrt.pop %v2093
  %v2244 = vmul.f32 %v2093, %v2243
  %vm2245 = vcmp.eq.f32.partialorder %v2093, inf
  %v2246 = vsel %vm2245, %v2093, %v2244
  %vm2247 = vcmp.eq.f32.partialorder %v2093, 0.0
  %v2248 = vand.u32 %v2093, 2147483648
  %v2249 = vsel %vm2247, %v2248, %v2246
  %v2250 = vrsqrt.pop %v2099
  %v2251 = vmul.f32 %v2099, %v2250
  %vm2252 = vcmp.eq.f32.partialorder %v2099, inf
  %v2253 = vsel %vm2252, %v2099, %v2251
  %vm2254 = vcmp.eq.f32.partialorder %v2099, 0.0
  %v2255 = vand.u32 %v2099, 2147483648
  %v2256 = vsel %vm2254, %v2255, %v2253
  %v2257 = vrsqrt.pop %v2105
  %v2258 = vmul.f32 %v2105, %v2257
  %vm2259 = vcmp.eq.f32.partialorder %v2105, inf
  %v2260 = vsel %vm2259, %v2105, %v2258
  %vm2261 = vcmp.eq.f32.partialorder %v2105, 0.0
  %v2262 = vand.u32 %v2105, 2147483648
  %v2263 = vsel %vm2261, %v2262, %v2260
  %v2264 = vrsqrt.pop %v2111
  %v2265 = vmul.f32 %v2111, %v2264
  %vm2266 = vcmp.eq.f32.partialorder %v2111, inf
  %v2267 = vsel %vm2266, %v2111, %v2265
  %vm2268 = vcmp.eq.f32.partialorder %v2111, 0.0
  %v2269 = vand.u32 %v2111, 2147483648
  %v2270 = vsel %vm2268, %v2269, %v2267
  %v2271 = vrsqrt.pop %v2117
  %v2272 = vmul.f32 %v2117, %v2271
  %vm2273 = vcmp.eq.f32.partialorder %v2117, inf
  %v2274 = vsel %vm2273, %v2117, %v2272
  %vm2275 = vcmp.eq.f32.partialorder %v2117, 0.0
  %v2276 = vand.u32 %v2117, 2147483648
  %v2277 = vsel %vm2275, %v2276, %v2274
  %v2278 = vrsqrt.pop %v2123
  %v2279 = vmul.f32 %v2123, %v2278
  %vm2280 = vcmp.eq.f32.partialorder %v2123, inf
  %v2281 = vsel %vm2280, %v2123, %v2279
  %vm2282 = vcmp.eq.f32.partialorder %v2123, 0.0
  %v2283 = vand.u32 %v2123, 2147483648
  %v2284 = vsel %vm2282, %v2283, %v2281
  %v2285 = vrsqrt.pop %v2129
  %v2286 = vmul.f32 %v2129, %v2285
  %vm2287 = vcmp.eq.f32.partialorder %v2129, inf
  %v2288 = vsel %vm2287, %v2129, %v2286
  %vm2289 = vcmp.eq.f32.partialorder %v2129, 0.0
  %v2290 = vand.u32 %v2129, 2147483648
  %v2291 = vsel %vm2289, %v2290, %v2288
  %v2292 = vrsqrt.pop %v2135
  %v2293 = vmul.f32 %v2135, %v2292
  %vm2294 = vcmp.eq.f32.partialorder %v2135, inf
  %v2295 = vsel %vm2294, %v2135, %v2293
  %vm2296 = vcmp.eq.f32.partialorder %v2135, 0.0
  %v2297 = vand.u32 %v2135, 2147483648
  %v2298 = vsel %vm2296, %v2297, %v2295
  %v2299 = vrsqrt.pop %v2141
  %v2300 = vmul.f32 %v2141, %v2299
  %vm2301 = vcmp.eq.f32.partialorder %v2141, inf
  %v2302 = vsel %vm2301, %v2141, %v2300
  %vm2303 = vcmp.eq.f32.partialorder %v2141, 0.0
  %v2304 = vand.u32 %v2141, 2147483648
  %v2305 = vsel %vm2303, %v2304, %v2302
  %v2306 = vrsqrt.pop %v2147
  %v2307 = vmul.f32 %v2147, %v2306
  %vm2308 = vcmp.eq.f32.partialorder %v2147, inf
  %v2309 = vsel %vm2308, %v2147, %v2307
  %vm2310 = vcmp.eq.f32.partialorder %v2147, 0.0
  %v2311 = vand.u32 %v2147, 2147483648
  %v2312 = vsel %vm2310, %v2311, %v2309
  %v2313 = vrsqrt.pop %v2153
  %v2314 = vmul.f32 %v2153, %v2313
  %vm2315 = vcmp.eq.f32.partialorder %v2153, inf
  %v2316 = vsel %vm2315, %v2153, %v2314
  %vm2317 = vcmp.eq.f32.partialorder %v2153, 0.0
  %v2318 = vand.u32 %v2153, 2147483648
  %v2319 = vsel %vm2317, %v2318, %v2316
  %v2320 = vrsqrt.pop %v2159
  %v2321 = vmul.f32 %v2159, %v2320
  %vm2322 = vcmp.eq.f32.partialorder %v2159, inf
  %v2323 = vsel %vm2322, %v2159, %v2321
  %vm2324 = vcmp.eq.f32.partialorder %v2159, 0.0
  %v2325 = vand.u32 %v2159, 2147483648
  %v2326 = vsel %vm2324, %v2325, %v2323
  %v2327 = vrsqrt.pop %v2165
  %v2328 = vmul.f32 %v2165, %v2327
  %vm2329 = vcmp.eq.f32.partialorder %v2165, inf
  %v2330 = vsel %vm2329, %v2165, %v2328
  %vm2331 = vcmp.eq.f32.partialorder %v2165, 0.0
  %v2332 = vand.u32 %v2165, 2147483648
  %v2333 = vsel %vm2331, %v2332, %v2330
  %v2334 = vadd.f32 %v2027, 1.0
  %v2335 = vadd.f32 %v2033, 1.0
  %v2336 = vadd.f32 %v2039, 1.0
  %v2337 = vadd.f32 %v2045, 1.0
  %v2338 = vadd.f32 %v2051, 1.0
  %v2339 = vadd.f32 %v2057, 1.0
  %v2340 = vadd.f32 %v2063, 1.0
  %v2341 = vadd.f32 %v2069, 1.0
  %v2342 = vadd.f32 %v2075, 1.0
  %v2343 = vadd.f32 %v2081, 1.0
  %v2344 = vadd.f32 %v2087, 1.0
  %v2345 = vadd.f32 %v2093, 1.0
  %v2346 = vadd.f32 %v2099, 1.0
  %v2347 = vadd.f32 %v2105, 1.0
  %v2348 = vadd.f32 %v2111, 1.0
  %v2349 = vadd.f32 %v2117, 1.0
  %v2350 = vadd.f32 %v2123, 1.0
  %v2351 = vadd.f32 %v2129, 1.0
  %v2352 = vadd.f32 %v2135, 1.0
  %v2353 = vadd.f32 %v2141, 1.0
  %v2354 = vadd.f32 %v2147, 1.0
  %v2355 = vadd.f32 %v2153, 1.0
  %v2356 = vadd.f32 %v2159, 1.0
  %v2357 = vadd.f32 %v2165, 1.0
  %v2358 = vadd.f32 %v2172, 1e-08
  %v2359 = vadd.f32 %v2179, 1e-08
  %v2360 = vadd.f32 %v2186, 1e-08
  %v2361 = vadd.f32 %v2193, 1e-08
  %v2362 = vadd.f32 %v2200, 1e-08
  %v2363 = vadd.f32 %v2207, 1e-08
  %v2364 = vadd.f32 %v2214, 1e-08
  %v2365 = vadd.f32 %v2221, 1e-08
  %v2366 = vadd.f32 %v2228, 1e-08
  %v2367 = vadd.f32 %v2235, 1e-08
  %v2368 = vadd.f32 %v2242, 1e-08
  %v2369 = vadd.f32 %v2249, 1e-08
  %v2370 = vadd.f32 %v2256, 1e-08
  %v2371 = vadd.f32 %v2263, 1e-08
  %v2372 = vadd.f32 %v2270, 1e-08
  %v2373 = vadd.f32 %v2277, 1e-08
  %v2374 = vadd.f32 %v2284, 1e-08
  %v2375 = vadd.f32 %v2291, 1e-08
  %v2376 = vadd.f32 %v2298, 1e-08
  %v2377 = vadd.f32 %v2305, 1e-08
  %v2378 = vadd.f32 %v2312, 1e-08
  %v2379 = vadd.f32 %v2319, 1e-08
  %v2380 = vadd.f32 %v2326, 1e-08
  %v2381 = vadd.f32 %v2333, 1e-08
  %v2382 = vmul.f32 %v2334, %v2358
  %v2383 = vmul.f32 %v2335, %v2359
  %v2384 = vmul.f32 %v2336, %v2360
  %v2385 = vmul.f32 %v2337, %v2361
  %v2386 = vmul.f32 %v2338, %v2362
  %v2387 = vmul.f32 %v2339, %v2363
  %v2388 = vmul.f32 %v2340, %v2364
  %v2389 = vmul.f32 %v2341, %v2365
  %v2390 = vmul.f32 %v2342, %v2366
  %v2391 = vmul.f32 %v2343, %v2367
  %v2392 = vmul.f32 %v2344, %v2368
  %v2393 = vmul.f32 %v2345, %v2369
  %v2394 = vmul.f32 %v2346, %v2370
  %v2395 = vmul.f32 %v2347, %v2371
  %v2396 = vmul.f32 %v2348, %v2372
  %v2397 = vmul.f32 %v2349, %v2373
  %v2398 = vmul.f32 %v2350, %v2374
  %v2399 = vmul.f32 %v2351, %v2375
  %v2400 = vmul.f32 %v2352, %v2376
  %v2401 = vmul.f32 %v2353, %v2377
  %v2402 = vmul.f32 %v2354, %v2378
  %v2403 = vmul.f32 %v2355, %v2379
  %v2404 = vmul.f32 %v2356, %v2380
  %v2405 = vmul.f32 %v2357, %v2381
  %v2406 = vrcp.pop %v2382
  %v2407 = vrcp.pop %v2383
  %v2408 = vrcp.pop %v2384
  %v2409 = vrcp.pop %v2385
  %v2410 = vrcp.pop %v2386
  %v2411 = vrcp.pop %v2387
  %v2412 = vrcp.pop %v2388
  %v2413 = vrcp.pop %v2389
  %v2414 = vrcp.pop %v2390
  %v2415 = vrcp.pop %v2391
  %v2416 = vrcp.pop %v2392
  %v2417 = vrcp.pop %v2393
  %v2418 = vrcp.pop %v2394
  %v2419 = vrcp.pop %v2395
  %v2420 = vrcp.pop %v2396
  %v2421 = vrcp.pop %v2397
  %v2422 = vrcp.pop %v2398
  %v2423 = vrcp.pop %v2399
  %v2424 = vrcp.pop %v2400
  %v2425 = vrcp.pop %v2401
  %v2426 = vrcp.pop %v2402
  %v2427 = vrcp.pop %v2403
  %v2428 = vrcp.pop %v2404
  %v2429 = vrcp.pop %v2405
  %v2430 = vmul.f32 %v2027, %v2406
  %v2431 = vmul.f32 %v2033, %v2407
  %v2432 = vmul.f32 %v2039, %v2408
  %v2433 = vmul.f32 %v2045, %v2409
  %v2434 = vmul.f32 %v2051, %v2410
  %v2435 = vmul.f32 %v2057, %v2411
  %v2436 = vmul.f32 %v2063, %v2412
  %v2437 = vmul.f32 %v2069, %v2413
  %v2438 = vmul.f32 %v2075, %v2414
  %v2439 = vmul.f32 %v2081, %v2415
  %v2440 = vmul.f32 %v2087, %v2416
  %v2441 = vmul.f32 %v2093, %v2417
  %v2442 = vmul.f32 %v2099, %v2418
  %v2443 = vmul.f32 %v2105, %v2419
  %v2444 = vmul.f32 %v2111, %v2420
  %v2445 = vmul.f32 %v2117, %v2421
  %v2446 = vmul.f32 %v2123, %v2422
  %v2447 = vmul.f32 %v2129, %v2423
  %v2448 = vmul.f32 %v2135, %v2424
  %v2449 = vmul.f32 %v2141, %v2425
  %v2450 = vmul.f32 %v2147, %v2426
  %v2451 = vmul.f32 %v2153, %v2427
  %v2452 = vmul.f32 %v2159, %v2428
  %v2453 = vmul.f32 %v2165, %v2429
  %v2454 = vmul.f32 %v2430, %v1620
  %v2455 = vmul.f32 %v2431, %v1622
  %v2456 = vmul.f32 %v2432, %v1798
  %v2457 = vmul.f32 %v2433, %v1800
  %v2458 = vmul.f32 %v2434, %v1976
  %v2459 = vmul.f32 %v2435, %v1978
  %v2460 = vmul.f32 %v2436, %v1626
  %v2461 = vmul.f32 %v2437, %v1628
  %v2462 = vmul.f32 %v2438, %v1804
  %v2463 = vmul.f32 %v2439, %v1806
  %v2464 = vmul.f32 %v2440, %v1982
  %v2465 = vmul.f32 %v2441, %v1984
  %v2466 = vmul.f32 %v2442, %v1632
  %v2467 = vmul.f32 %v2443, %v1634
  %v2468 = vmul.f32 %v2444, %v1810
  %v2469 = vmul.f32 %v2445, %v1812
  %v2470 = vmul.f32 %v2446, %v1988
  %v2471 = vmul.f32 %v2447, %v1990
  %v2472 = vmul.f32 %v2448, %v1638
  %v2473 = vmul.f32 %v2449, %v1640
  %v2474 = vmul.f32 %v2450, %v1816
  %v2475 = vmul.f32 %v2451, %v1818
  %v2476 = vmul.f32 %v2452, %v1994
  %v2477 = vmul.f32 %v2453, %v1996
  %2478 = vst [vmem:[%s3] sm:$0xff] %v2454
  %2479 = vst [vmem:[%s3 + $0x8] sm:$0xff] %v2455
  %2480 = vst [vmem:[%s3 + $0x10] sm:$0xff] %v2456
  %2481 = vst [vmem:[%s3 + $0x18] sm:$0xff] %v2457
  %2482 = vst [vmem:[%s3 + $0x20] sm:$0xff] %v2458
  %2483 = vst [vmem:[%s3 + $0x28] sm:$0xff] %v2459
  %2484 = vst [vmem:[%s3 + $0x30] sm:$0xff] %v2460
  %2485 = vst [vmem:[%s3 + $0x38] sm:$0xff] %v2461
  %2486 = vst [vmem:[%s3 + $0x40] sm:$0xff] %v2462
  %2487 = vst [vmem:[%s3 + $0x48] sm:$0xff] %v2463
  %2488 = vst [vmem:[%s3 + $0x50] sm:$0xff] %v2464
  %2489 = vst [vmem:[%s3 + $0x58] sm:$0xff] %v2465
  %2490 = vst [vmem:[%s3 + $0x60] sm:$0xff] %v2466
  %2491 = vst [vmem:[%s3 + $0x68] sm:$0xff] %v2467
  %2492 = vst [vmem:[%s3 + $0x70] sm:$0xff] %v2468
  %2493 = vst [vmem:[%s3 + $0x78] sm:$0xff] %v2469
  %2494 = vst [vmem:[%s3 + $0x80] sm:$0xff] %v2470
  %2495 = vst [vmem:[%s3 + $0x88] sm:$0xff] %v2471
  %2496 = vst [vmem:[%s3 + $0x90] sm:$0xff] %v2472
  %2497 = vst [vmem:[%s3 + $0x98] sm:$0xff] %v2473
  %2498 = vst [vmem:[%s3 + $0xa0] sm:$0xff] %v2474
  %2499 = vst [vmem:[%s3 + $0xa8] sm:$0xff] %v2475
  %2500 = vst [vmem:[%s3 + $0xb0] sm:$0xff] %v2476
  %2501 = vst [vmem:[%s3 + $0xb8] sm:$0xff] %v2477
  // Predicated region
  $region14: #{conv_capsule_forward.1} parent=0 // pred_check
    _
  $region15: #{conv_capsule_forward.1} parent=0 // pred_check_branch
    %2503 = sbr.rel (0) target = $region17
  $region16: #{conv_capsule_forward.1} parent=0 // pred_region
    _
  $region17: #{conv_capsule_forward.1} parent=0 // pred_fallthru
    _
  // Predicated region
  $region18: #{conv_capsule_forward.1} parent=0 // pred_check
    _
  $region19: #{conv_capsule_forward.1} parent=0 // pred_check_branch
    %2505 = sbr.rel (0) target = $region21
  $region20: #{conv_capsule_forward.1} parent=0 // pred_region
    _
  $region21: #{conv_capsule_forward.1} parent=0 // pred_fallthru
    _

</llo_original>
